<compile_context>
chip_gen: v7x
topology: tpu7x:2x2x1
jax: 0.10.0
libtpu: 0.0.40
codegen_flags: <defaults>
</compile_context>

<pallas_src>
import jax
import jax.numpy as jnp
from jax.experimental import pallas as pl
from jax.experimental.pallas import tpu as pltpu

CLIP = 0.3           # dist.sample(clip=0.3)
LOW, HIGH = -1.0, 1.0
TRUNC_EPS = 1e-6     # TruncatedNormal clamp epsilon
LANE = 128           # TPU lane width


def policy_kernel(x_ref, w1_ref, b1_ref, w2_ref, b2_ref, w3_ref, b3_ref,
                  eps_ref, out_ref):
    a_dim = out_ref.shape[-1]
    x = x_ref[...]                                        # (TB, latent) bf16

    # Layer 1: Linear(latent, 64 -> padded 128) + ReLU   (f32 accumulate)
    h1 = jnp.dot(x, w1_ref[...], preferred_element_type=jnp.float32) + b1_ref[...]
    h1 = jnp.maximum(h1, 0.0).astype(jnp.bfloat16)        # padded lanes stay exactly 0

    # Layer 2: Linear(64 -> padded 128, 128) + ReLU
    h2 = jnp.dot(h1, w2_ref[...], preferred_element_type=jnp.float32) + b2_ref[...]
    h2 = jnp.maximum(h2, 0.0).astype(jnp.bfloat16)

    # Layer 3 (fused mu|log_std): Linear(128, 2*A -> padded 128); real outputs in lanes [0, 2A)
    y = jnp.dot(h2, w3_ref[...], preferred_element_type=jnp.float32) + b3_ref[...]
    mu = y[:, :a_dim]
    log_std = y[:, a_dim:2 * a_dim]

    # std = tanh(log_std).exp() + 0.001
    std = jnp.exp(jnp.tanh(log_std)) + 0.001

    # TruncatedNormal(mu, std).sample(clip=0.3):
    #   eps ~ N(0,1); eps *= std; clamp(eps, ±clip); x = mu + eps; clamp to (low+eps, high-eps)
    # TODO(synk): generate eps in-kernel via pltpu.prng_seed/prng_random_bits to
    # drop the eps HBM stream; kept as an input here for deterministic testing.
    noise = jnp.clip(eps_ref[...] * std, -CLIP, CLIP)
    sample = mu + noise
    out_ref[...] = jnp.clip(sample, LOW + TRUNC_EPS, HIGH - TRUNC_EPS)


def init_params(key, latent_dim, action_dim):
    """Deterministic PyTorch-style uniform init; weights stored (in, out)."""
    dims = [(latent_dim, 64), (64, 128), (128, action_dim * 2)]
    params = []
    for fan_in, fan_out in dims:
        key, kw, kb = jax.random.split(key, 3)
        bound = 1.0 / jnp.sqrt(fan_in)
        w = jax.random.uniform(kw, (fan_in, fan_out), jnp.float32, -bound, bound)
        b = jax.random.uniform(kb, (1, fan_out), jnp.float32, -bound, bound)
        params.append((w, b))
    return params


def _prep_params(params, action_dim):
    """Zero-pad to 128-lane-dense slabs; cast matmul weights to bf16, biases f32."""
    (w1, b1), (w2, b2), (w3, b3) = params
    h1 = w1.shape[1]                                   # 64
    assert w2.shape == (h1, LANE)
    assert w3.shape == (LANE, 2 * action_dim) and 2 * action_dim <= LANE

    w1p = jnp.pad(w1, ((0, 0), (0, LANE - h1))).astype(jnp.bfloat16)
    b1p = jnp.pad(b1, ((0, 0), (0, LANE - h1))).astype(jnp.float32)
    w2p = jnp.pad(w2, ((0, LANE - h1), (0, 0))).astype(jnp.bfloat16)   # zero rows for padded h1 lanes
    b2p = b2.astype(jnp.float32)
    w3p = jnp.pad(w3, ((0, 0), (0, LANE - 2 * action_dim))).astype(jnp.bfloat16)
    b3p = jnp.pad(b3, ((0, 0), (0, LANE - 2 * action_dim))).astype(jnp.float32)
    return w1p, b1p, w2p, b2p, w3p, b3p


def policy_forward(latent_z, params, eps, action_dim, *, block_batch=256):
    B, latent_dim = latent_z.shape
    w1p, b1p, w2p, b2p, w3p, b3p = _prep_params(params, action_dim)

    x = latent_z.astype(jnp.bfloat16)     # bf16 MXU operands (f32 accumulation in-kernel)
    eps = eps.astype(jnp.float32)

    tb = min(block_batch, B)
    grid = (pl.cdiv(B, tb),)

    def batch_spec(cols):
        return pl.BlockSpec((tb, cols), lambda i: (i, 0))

    def const_spec(rows, cols):
        return pl.BlockSpec((rows, cols), lambda i: (0, 0))   # weights stay VMEM-resident

    return pl.pallas_call(
        policy_kernel,
        out_shape=jax.ShapeDtypeStruct((B, action_dim), jnp.float32),
        grid=grid,
        in_specs=[
            batch_spec(latent_dim),            # latent_z
            const_spec(latent_dim, LANE),      # w1 (lane-padded)
            const_spec(1, LANE),               # b1 (lane-padded)
            const_spec(LANE, LANE),            # w2 (row-padded)
            const_spec(1, LANE),               # b2
            const_spec(LANE, LANE),            # w3 (fused mu|log_std, lane-padded)
            const_spec(1, LANE),               # b3 (lane-padded)
            batch_spec(action_dim),            # eps
        ],
        out_specs=batch_spec(action_dim),
        compiler_params=pltpu.CompilerParams(
            dimension_semantics=("parallel",)),
    )(x, w1p, b1p, w2p, b2p, w3p, b3p, eps)


def policy_forward_ref(latent_z, params, eps, action_dim):
    """Pure-JAX f32 reference matching the PyTorch forward."""
    (w1, b1), (w2, b2), (w3, b3) = params
    h1 = jax.nn.relu(latent_z @ w1 + b1)
    h2 = jax.nn.relu(h1 @ w2 + b2)
    y = h2 @ w3 + b3
    mu, log_std = y[:, :action_dim], y[:, action_dim:]
    std = jnp.exp(jnp.tanh(log_std)) + 0.001
    noise = jnp.clip(eps * std, -CLIP, CLIP)
    return jnp.clip(mu + noise, LOW + TRUNC_EPS, HIGH - TRUNC_EPS)


if __name__ == "__main__":
    latent_dim = 32
    action_dim = 8
    batch = 512            # 2 grid steps at block_batch=256 (exercises the batch grid)

    key = jax.random.PRNGKey(0)
    k_params, k_z, k_eps = jax.random.split(key, 3)

    params = init_params(k_params, latent_dim, action_dim)
    latent_z = jax.random.normal(k_z, (batch, latent_dim), jnp.float32)
    eps = jax.random.normal(k_eps, (batch, action_dim), jnp.float32)

    out = policy_forward(latent_z, params, eps, action_dim)
    jax.block_until_ready(out)

    assert out.shape == (batch, action_dim)
    assert bool(jnp.all(jnp.abs(out) <= 1.0))

    ref = policy_forward_ref(latent_z, params, eps, action_dim)
    max_err = float(jnp.max(jnp.abs(out - ref)))
    assert max_err < 2e-2, f"mismatch vs reference: {max_err}"
    print("KERNEL_OK")
</pallas_src>

<mosaic_0001>
module attributes {stable_mosaic.version = 11 : i64} {
  func.func @policy_kernel(%arg0: i32, %arg1: memref<256x32xbf16, #tpu.memory_space<vmem>>, %arg2: memref<32x128xbf16, #tpu.memory_space<vmem>>, %arg3: memref<1x128xf32, #tpu.memory_space<vmem>>, %arg4: memref<128x128xbf16, #tpu.memory_space<vmem>>, %arg5: memref<1x128xf32, #tpu.memory_space<vmem>>, %arg6: memref<128x128xbf16, #tpu.memory_space<vmem>>, %arg7: memref<1x128xf32, #tpu.memory_space<vmem>>, %arg8: memref<256x8xf32, #tpu.memory_space<vmem>>, %arg9: memref<256x8xf32, #tpu.memory_space<vmem>>) attributes {dimension_semantics = [#tpu.dimension_semantics<parallel>], iteration_bounds = array<i64: 2>, scalar_prefetch = 0 : i64, scratch_operands = 0 : i64, tpu.core_type = #tpu.core_type<tc>, window_params = [{transform_indices = @transform_0, window_bounds = array<i64: 256, 32>}, {pipeline_mode = #tpu.pipeline_mode<synchronous>, transform_indices = @transform_1, window_bounds = array<i64: 32, 128>}, {pipeline_mode = #tpu.pipeline_mode<synchronous>, transform_indices = @transform_2, window_bounds = array<i64: 1, 128>}, {pipeline_mode = #tpu.pipeline_mode<synchronous>, transform_indices = @transform_3, window_bounds = array<i64: 128, 128>}, {pipeline_mode = #tpu.pipeline_mode<synchronous>, transform_indices = @transform_4, window_bounds = array<i64: 1, 128>}, {pipeline_mode = #tpu.pipeline_mode<synchronous>, transform_indices = @transform_5, window_bounds = array<i64: 128, 128>}, {pipeline_mode = #tpu.pipeline_mode<synchronous>, transform_indices = @transform_6, window_bounds = array<i64: 1, 128>}, {transform_indices = @transform_7, window_bounds = array<i64: 256, 8>}, {transform_indices = @transform_8, window_bounds = array<i64: 256, 8>}]} {
    %c0 = arith.constant 0 : index
    %c0_0 = arith.constant 0 : index
    %0 = vector.load %arg1[%c0, %c0_0] : memref<256x32xbf16, #tpu.memory_space<vmem>>, vector<256x32xbf16>
    %c0_1 = arith.constant 0 : index
    %c0_2 = arith.constant 0 : index
    %1 = vector.load %arg2[%c0_1, %c0_2] : memref<32x128xbf16, #tpu.memory_space<vmem>>, vector<32x128xbf16>
    %cst = arith.constant dense<0.000000e+00> : vector<256x128xf32>
    %2 = tpu.matmul %0, %1, %cst {dimension_numbers = #tpu.dot_dimension_numbers<[1], [0], [0], [1], [0, 0, 1, 1], [], []>} : vector<256x32xbf16>, vector<32x128xbf16>, vector<256x128xf32> -> vector<256x128xf32>
    %c0_3 = arith.constant 0 : index
    %c0_4 = arith.constant 0 : index
    %3 = vector.load %arg3[%c0_3, %c0_4] : memref<1x128xf32, #tpu.memory_space<vmem>>, vector<1x128xf32>
    %4 = vector.broadcast %3 : vector<1x128xf32> to vector<256x128xf32>
    %5 = arith.addf %2, %4 : vector<256x128xf32>
    %cst_5 = arith.constant 0.000000e+00 : f32
    %6 = vector.broadcast %cst_5 : f32 to vector<256x128xf32>
    %7 = arith.maximumf %5, %6 : vector<256x128xf32>
    %8 = arith.truncf %7 : vector<256x128xf32> to vector<256x128xbf16>
    %c0_6 = arith.constant 0 : index
    %c0_7 = arith.constant 0 : index
    %9 = vector.load %arg4[%c0_6, %c0_7] : memref<128x128xbf16, #tpu.memory_space<vmem>>, vector<128x128xbf16>
    %cst_8 = arith.constant dense<0.000000e+00> : vector<256x128xf32>
    %10 = tpu.matmul %8, %9, %cst_8 {dimension_numbers = #tpu.dot_dimension_numbers<[1], [0], [0], [1], [0, 0, 1, 1], [], []>} : vector<256x128xbf16>, vector<128x128xbf16>, vector<256x128xf32> -> vector<256x128xf32>
    %c0_9 = arith.constant 0 : index
    %c0_10 = arith.constant 0 : index
    %11 = vector.load %arg5[%c0_9, %c0_10] : memref<1x128xf32, #tpu.memory_space<vmem>>, vector<1x128xf32>
    %12 = vector.broadcast %11 : vector<1x128xf32> to vector<256x128xf32>
    %13 = arith.addf %10, %12 : vector<256x128xf32>
    %cst_11 = arith.constant 0.000000e+00 : f32
    %14 = vector.broadcast %cst_11 : f32 to vector<256x128xf32>
    %15 = arith.maximumf %13, %14 : vector<256x128xf32>
    %16 = arith.truncf %15 : vector<256x128xf32> to vector<256x128xbf16>
    %c0_12 = arith.constant 0 : index
    %c0_13 = arith.constant 0 : index
    %17 = vector.load %arg6[%c0_12, %c0_13] : memref<128x128xbf16, #tpu.memory_space<vmem>>, vector<128x128xbf16>
    %cst_14 = arith.constant dense<0.000000e+00> : vector<256x128xf32>
    %18 = tpu.matmul %16, %17, %cst_14 {dimension_numbers = #tpu.dot_dimension_numbers<[1], [0], [0], [1], [0, 0, 1, 1], [], []>} : vector<256x128xbf16>, vector<128x128xbf16>, vector<256x128xf32> -> vector<256x128xf32>
    %c0_15 = arith.constant 0 : index
    %c0_16 = arith.constant 0 : index
    %19 = vector.load %arg7[%c0_15, %c0_16] : memref<1x128xf32, #tpu.memory_space<vmem>>, vector<1x128xf32>
    %20 = vector.broadcast %19 : vector<1x128xf32> to vector<256x128xf32>
    %21 = arith.addf %18, %20 : vector<256x128xf32>
    %22 = vector.extract_strided_slice %21 {offsets = [0, 0], sizes = [256, 8], strides = [1, 1]} : vector<256x128xf32> to vector<256x8xf32>
    %23 = vector.extract_strided_slice %21 {offsets = [0, 8], sizes = [256, 8], strides = [1, 1]} : vector<256x128xf32> to vector<256x8xf32>
    %24 = math.tanh %23 : vector<256x8xf32>
    %25 = math.exp %24 : vector<256x8xf32>
    %cst_17 = arith.constant 1.000000e-03 : f32
    %26 = vector.broadcast %cst_17 : f32 to vector<256x8xf32>
    %27 = arith.addf %25, %26 : vector<256x8xf32>
    %c0_18 = arith.constant 0 : index
    %c0_19 = arith.constant 0 : index
    %28 = vector.load %arg8[%c0_18, %c0_19] : memref<256x8xf32, #tpu.memory_space<vmem>>, vector<256x8xf32>
    %29 = arith.mulf %28, %27 : vector<256x8xf32>
    %cst_20 = arith.constant -3.000000e-01 : f32
    %cst_21 = arith.constant 3.000000e-01 : f32
    %30 = vector.broadcast %cst_20 : f32 to vector<256x8xf32>
    %31 = arith.maximumf %30, %29 : vector<256x8xf32>
    %32 = vector.broadcast %cst_21 : f32 to vector<256x8xf32>
    %33 = arith.minimumf %32, %31 : vector<256x8xf32>
    %34 = arith.addf %22, %33 : vector<256x8xf32>
    %cst_22 = arith.constant -0.999998986 : f32
    %cst_23 = arith.constant 0.999998986 : f32
    %35 = vector.broadcast %cst_22 : f32 to vector<256x8xf32>
    %36 = arith.maximumf %35, %34 : vector<256x8xf32>
    %37 = vector.broadcast %cst_23 : f32 to vector<256x8xf32>
    %38 = arith.minimumf %37, %36 : vector<256x8xf32>
    %c0_24 = arith.constant 0 : index
    %c0_25 = arith.constant 0 : index
    %39 = vector.load %arg9[%c0_24, %c0_25] : memref<256x8xf32, #tpu.memory_space<vmem>>, vector<256x8xf32>
    tpu.vector_store %arg9[%c0_24, %c0_25], %38 {strides = array<i32>} : memref<256x8xf32, #tpu.memory_space<vmem>>, vector<256x8xf32>,
    return
  }
  func.func @transform_0(%arg0: i32) -> (i32, i32) {
    %c0_i32 = arith.constant 0 : i32
    %c0_i32_0 = arith.constant 0 : i32
    return %arg0, %c0_i32 : i32, i32
  }
  func.func @transform_1(%arg0: i32) -> (i32, i32) {
    %c0_i32 = arith.constant 0 : i32
    %c0_i32_0 = arith.constant 0 : i32
    %c0_i32_1 = arith.constant 0 : i32
    return %c0_i32, %c0_i32_0 : i32, i32
  }
  func.func @transform_2(%arg0: i32) -> (i32, i32) {
    %c0_i32 = arith.constant 0 : i32
    %c0_i32_0 = arith.constant 0 : i32
    %c0_i32_1 = arith.constant 0 : i32
    return %c0_i32, %c0_i32_0 : i32, i32
  }
  func.func @transform_3(%arg0: i32) -> (i32, i32) {
    %c0_i32 = arith.constant 0 : i32
    %c0_i32_0 = arith.constant 0 : i32
    %c0_i32_1 = arith.constant 0 : i32
    return %c0_i32, %c0_i32_0 : i32, i32
  }
  func.func @transform_4(%arg0: i32) -> (i32, i32) {
    %c0_i32 = arith.constant 0 : i32
    %c0_i32_0 = arith.constant 0 : i32
    %c0_i32_1 = arith.constant 0 : i32
    return %c0_i32, %c0_i32_0 : i32, i32
  }
  func.func @transform_5(%arg0: i32) -> (i32, i32) {
    %c0_i32 = arith.constant 0 : i32
    %c0_i32_0 = arith.constant 0 : i32
    %c0_i32_1 = arith.constant 0 : i32
    return %c0_i32, %c0_i32_0 : i32, i32
  }
  func.func @transform_6(%arg0: i32) -> (i32, i32) {
    %c0_i32 = arith.constant 0 : i32
    %c0_i32_0 = arith.constant 0 : i32
    %c0_i32_1 = arith.constant 0 : i32
    return %c0_i32, %c0_i32_0 : i32, i32
  }
  func.func @transform_7(%arg0: i32) -> (i32, i32) {
    %c0_i32 = arith.constant 0 : i32
    %c0_i32_0 = arith.constant 0 : i32
    return %arg0, %c0_i32 : i32, i32
  }
  func.func @transform_8(%arg0: i32) -> (i32, i32) {
    %c0_i32 = arith.constant 0 : i32
    %c0_i32_0 = arith.constant 0 : i32
    return %arg0, %c0_i32 : i32, i32
  }
}

</mosaic_0001>

<llo_original>
// kernel: tpu_custom_call.1
$region0: #{tpu_custom_call.1}
  #allocation0 [shape = 'u32[]', space=smem, size = 0x4, offset = 0x4, fixed_abs, tag = 'smem constant byte address 0x4 - core index']
  #allocation1 [shape = 'u32[144,128]{1,0:T(1,128)}', space=vmem, size = 0x12000, scoped, tag = 'internal scratch']
  %s0 = inlined_call_operand.vmem [shape: bf16[512,32], index: 0, kind: input, shape index: {}]
  %s1 = inlined_call_operand.vmem [shape: bf16[32,128], index: 1, kind: input, shape index: {}]
  %s2 = inlined_call_operand.vmem [shape: f32[1,128], index: 2, kind: input, shape index: {}]
  %s3 = inlined_call_operand.vmem [shape: bf16[128,128], index: 3, kind: input, shape index: {}]
  %s4 = inlined_call_operand.vmem [shape: f32[1,128], index: 4, kind: input, shape index: {}]
  %s5 = inlined_call_operand.vmem [shape: bf16[128,128], index: 5, kind: input, shape index: {}]
  %s6 = inlined_call_operand.vmem [shape: f32[1,128], index: 6, kind: input, shape index: {}]
  %s7 = inlined_call_operand.vmem [shape: f32[512,8], index: 7, kind: input, shape index: {}]
  %s8 = inlined_call_operand.vmem [shape: f32[512,8], index: 8, kind: output, shape index: {}]
  %s9 = sld [smem:[#allocation0]]
  $region65: #{tpu_custom_call.1} parent=0
    _
  %s11 = ssub.s32 1, %s9
  %s12 = scalar_select 0, %s11, %s9
  loop: start=0, step=1, limit=4
  $region2: #{tpu_custom_call.1} parent=0 // loop_pre_header
    _
  $region3: #{tpu_custom_call.1} parent=0 // loop_header
    %s14 = sphi 0, %s18
    %p15 = scmp.ge.s32.totalorder %s14, 4
    %s24 = sphi 0, %s26
    %s27 = sphi 0, %s24
    %s28 = sphi 0, %s27
    %s44 = sphi 0, %s28
    %s48 = sphi 0, %s48
    %s50 = sphi 0, %s48
    %s51 = sphi 0, %s50
    %s65 = sphi 0, %s51
    %s69 = sphi 0, %s69
    %s71 = sphi 0, %s69
    %s72 = sphi 0, %s71
    %s86 = sphi 0, %s72
    %s90 = sphi 0, %s90
    %s92 = sphi 0, %s90
    %s93 = sphi 0, %s92
    %s107 = sphi 0, %s93
    %s111 = sphi 0, %s111
    %s113 = sphi 0, %s111
    %s114 = sphi 0, %s113
    %s128 = sphi 0, %s114
    %s132 = sphi 0, %s132
    %s134 = sphi 0, %s132
    %s135 = sphi 0, %s134
    %s149 = sphi 0, %s135
    %s153 = sphi 0, %s153
    %s155 = sphi 0, %s153
    %s156 = sphi 0, %s155
    %s170 = sphi 0, %s156
    %s176 = sphi 0, %s178
    %s179 = sphi 0, %s176
    %s180 = sphi 0, %s179
    %s196 = sphi 0, %s180
    %s202 = sphi 0, %s204
    %s205 = sphi 0, %s202
    %s206 = sphi 0, %s205
    %s222 = sphi 0, %s206
  $region4: #{tpu_custom_call.1} parent=0 // loop_header_branch
    %17 = sbr.rel (%p15) target = $region8
  $region5: #{tpu_custom_call.1} parent=0 // loop_body
    %s19 = ssub.s32 %s14, 1
    %s20 = ssub.s32 %s14, 2
    %s21 = sadd.s32 %s14, 1
    %s22 = ssub.s32 %s14, %s21
    %p23 = scmp.eq.s32.totalorder %s22, 0
    %s25 = sadd.s32 %s24, 1
    %s26 = scalar_select %p23, %s24, %s25
    %p29 = pneg %p23
    %p30 = scmp.eq.s32.totalorder %s14, 1
    %p31 = por %p29, %p30
    %p32 = scmp.ne.s32.totalorder %s24, %s27
    %p33 = scmp.eq.s32.totalorder %s14, 0
    %p34 = por %p32, %p33
    %p35 = scmp.ne.s32.totalorder %s24, %s27
    %p36 = scmp.eq.s32.totalorder %s19, 1
    %p37 = por %p35, %p36
    %p38 = scmp.ne.s32.totalorder %s27, %s28
    %p39 = scmp.eq.s32.totalorder %s19, 0
    %p40 = por %p38, %p39
    %p41 = scmp.ne.s32.totalorder %s27, %s28
    %p42 = scmp.eq.s32.totalorder %s20, 1
    %p43 = por %p41, %p42
    %p45 = scmp.ne.s32.totalorder %s28, %s44
    %p46 = scmp.eq.s32.totalorder %s20, 0
    %p47 = por %p45, %p46
    %s49 = sadd.s32 %s48, 1
    %p52 = scmp.eq.s32.totalorder %s14, 1
    %p53 = scmp.ne.s32.totalorder %s48, %s50
    %p54 = scmp.eq.s32.totalorder %s14, 0
    %p55 = por %p53, %p54
    %p56 = scmp.ne.s32.totalorder %s48, %s50
    %p57 = scmp.eq.s32.totalorder %s19, 1
    %p58 = por %p56, %p57
    %p59 = scmp.ne.s32.totalorder %s50, %s51
    %p60 = scmp.eq.s32.totalorder %s19, 0
    %p61 = por %p59, %p60
    %p62 = scmp.ne.s32.totalorder %s50, %s51
    %p63 = scmp.eq.s32.totalorder %s20, 1
    %p64 = por %p62, %p63
    %p66 = scmp.ne.s32.totalorder %s51, %s65
    %p67 = scmp.eq.s32.totalorder %s20, 0
    %p68 = por %p66, %p67
    %s70 = sadd.s32 %s69, 1
    %p73 = scmp.eq.s32.totalorder %s14, 1
    %p74 = scmp.ne.s32.totalorder %s69, %s71
    %p75 = scmp.eq.s32.totalorder %s14, 0
    %p76 = por %p74, %p75
    %p77 = scmp.ne.s32.totalorder %s69, %s71
    %p78 = scmp.eq.s32.totalorder %s19, 1
    %p79 = por %p77, %p78
    %p80 = scmp.ne.s32.totalorder %s71, %s72
    %p81 = scmp.eq.s32.totalorder %s19, 0
    %p82 = por %p80, %p81
    %p83 = scmp.ne.s32.totalorder %s71, %s72
    %p84 = scmp.eq.s32.totalorder %s20, 1
    %p85 = por %p83, %p84
    %p87 = scmp.ne.s32.totalorder %s72, %s86
    %p88 = scmp.eq.s32.totalorder %s20, 0
    %p89 = por %p87, %p88
    %s91 = sadd.s32 %s90, 1
    %p94 = scmp.eq.s32.totalorder %s14, 1
    %p95 = scmp.ne.s32.totalorder %s90, %s92
    %p96 = scmp.eq.s32.totalorder %s14, 0
    %p97 = por %p95, %p96
    %p98 = scmp.ne.s32.totalorder %s90, %s92
    %p99 = scmp.eq.s32.totalorder %s19, 1
    %p100 = por %p98, %p99
    %p101 = scmp.ne.s32.totalorder %s92, %s93
    %p102 = scmp.eq.s32.totalorder %s19, 0
    %p103 = por %p101, %p102
    %p104 = scmp.ne.s32.totalorder %s92, %s93
    %p105 = scmp.eq.s32.totalorder %s20, 1
    %p106 = por %p104, %p105
    %p108 = scmp.ne.s32.totalorder %s93, %s107
    %p109 = scmp.eq.s32.totalorder %s20, 0
    %p110 = por %p108, %p109
    %s112 = sadd.s32 %s111, 1
    %p115 = scmp.eq.s32.totalorder %s14, 1
    %p116 = scmp.ne.s32.totalorder %s111, %s113
    %p117 = scmp.eq.s32.totalorder %s14, 0
    %p118 = por %p116, %p117
    %p119 = scmp.ne.s32.totalorder %s111, %s113
    %p120 = scmp.eq.s32.totalorder %s19, 1
    %p121 = por %p119, %p120
    %p122 = scmp.ne.s32.totalorder %s113, %s114
    %p123 = scmp.eq.s32.totalorder %s19, 0
    %p124 = por %p122, %p123
    %p125 = scmp.ne.s32.totalorder %s113, %s114
    %p126 = scmp.eq.s32.totalorder %s20, 1
    %p127 = por %p125, %p126
    %p129 = scmp.ne.s32.totalorder %s114, %s128
    %p130 = scmp.eq.s32.totalorder %s20, 0
    %p131 = por %p129, %p130
    %s133 = sadd.s32 %s132, 1
    %p136 = scmp.eq.s32.totalorder %s14, 1
    %p137 = scmp.ne.s32.totalorder %s132, %s134
    %p138 = scmp.eq.s32.totalorder %s14, 0
    %p139 = por %p137, %p138
    %p140 = scmp.ne.s32.totalorder %s132, %s134
    %p141 = scmp.eq.s32.totalorder %s19, 1
    %p142 = por %p140, %p141
    %p143 = scmp.ne.s32.totalorder %s134, %s135
    %p144 = scmp.eq.s32.totalorder %s19, 0
    %p145 = por %p143, %p144
    %p146 = scmp.ne.s32.totalorder %s134, %s135
    %p147 = scmp.eq.s32.totalorder %s20, 1
    %p148 = por %p146, %p147
    %p150 = scmp.ne.s32.totalorder %s135, %s149
    %p151 = scmp.eq.s32.totalorder %s20, 0
    %p152 = por %p150, %p151
    %s154 = sadd.s32 %s153, 1
    %p157 = scmp.eq.s32.totalorder %s14, 1
    %p158 = scmp.ne.s32.totalorder %s153, %s155
    %p159 = scmp.eq.s32.totalorder %s14, 0
    %p160 = por %p158, %p159
    %p161 = scmp.ne.s32.totalorder %s153, %s155
    %p162 = scmp.eq.s32.totalorder %s19, 1
    %p163 = por %p161, %p162
    %p164 = scmp.ne.s32.totalorder %s155, %s156
    %p165 = scmp.eq.s32.totalorder %s19, 0
    %p166 = por %p164, %p165
    %p167 = scmp.ne.s32.totalorder %s155, %s156
    %p168 = scmp.eq.s32.totalorder %s20, 1
    %p169 = por %p167, %p168
    %p171 = scmp.ne.s32.totalorder %s156, %s170
    %p172 = scmp.eq.s32.totalorder %s20, 0
    %p173 = por %p171, %p172
    %s174 = ssub.s32 %s14, %s21
    %p175 = scmp.eq.s32.totalorder %s174, 0
    %s177 = sadd.s32 %s176, 1
    %s178 = scalar_select %p175, %s176, %s177
    %p181 = pneg %p175
    %p182 = scmp.eq.s32.totalorder %s14, 1
    %p183 = por %p181, %p182
    %p184 = scmp.ne.s32.totalorder %s176, %s179
    %p185 = scmp.eq.s32.totalorder %s14, 0
    %p186 = por %p184, %p185
    %p187 = scmp.ne.s32.totalorder %s176, %s179
    %p188 = scmp.eq.s32.totalorder %s19, 1
    %p189 = por %p187, %p188
    %p190 = scmp.ne.s32.totalorder %s179, %s180
    %p191 = scmp.eq.s32.totalorder %s19, 0
    %p192 = por %p190, %p191
    %p193 = scmp.ne.s32.totalorder %s179, %s180
    %p194 = scmp.eq.s32.totalorder %s20, 1
    %p195 = por %p193, %p194
    %p197 = scmp.ne.s32.totalorder %s180, %s196
    %p198 = scmp.eq.s32.totalorder %s20, 0
    %p199 = por %p197, %p198
    %s200 = ssub.s32 %s14, %s21
    %p201 = scmp.eq.s32.totalorder %s200, 0
    %s203 = sadd.s32 %s202, 1
    %s204 = scalar_select %p201, %s202, %s203
    %p207 = pneg %p201
    %p208 = scmp.eq.s32.totalorder %s14, 1
    %p209 = por %p207, %p208
    %p210 = scmp.ne.s32.totalorder %s202, %s205
    %p211 = scmp.eq.s32.totalorder %s14, 0
    %p212 = por %p210, %p211
    %p213 = scmp.ne.s32.totalorder %s202, %s205
    %p214 = scmp.eq.s32.totalorder %s19, 1
    %p215 = por %p213, %p214
    %p216 = scmp.ne.s32.totalorder %s205, %s206
    %p217 = scmp.eq.s32.totalorder %s19, 0
    %p218 = por %p216, %p217
    %p219 = scmp.ne.s32.totalorder %s205, %s206
    %p220 = scmp.eq.s32.totalorder %s20, 1
    %p221 = por %p219, %p220
    %p223 = scmp.ne.s32.totalorder %s206, %s222
    %p224 = scmp.eq.s32.totalorder %s20, 0
    %p225 = por %p223, %p224
    %p226 = scmp.le.s32.totalorder 1, %s14
    %p227 = scmp.lt.s32.totalorder %s14, 3
    %p228 = pnand %p226, %p227
    %p229 = pneg %p228
    // Predicated region
    $region9: #{tpu_custom_call.1} parent=5 // pred_check
      _
    $region10: #{tpu_custom_call.1} parent=5 // pred_check_branch
      %231 = sbr.rel (%p228) target = $region12
    $region11: #{tpu_custom_call.1} parent=5 // pred_region
      %s232 = ssub.s32 %s14, 1
      // Predicated region
      $region13: #{tpu_custom_call.1} parent=11 // pred_check
        %p233 = pneg %p61
      $region14: #{tpu_custom_call.1} parent=11 // pred_check_branch
        %235 = sbr.rel (%p233) target = $region16
      $region15: #{tpu_custom_call.1} parent=11 // pred_region
        _
      $region16: #{tpu_custom_call.1} parent=11 // pred_fallthru
        _
      // Predicated region
      $region17: #{tpu_custom_call.1} parent=11 // pred_check
        %p236 = pneg %p82
      $region18: #{tpu_custom_call.1} parent=11 // pred_check_branch
        %238 = sbr.rel (%p236) target = $region20
      $region19: #{tpu_custom_call.1} parent=11 // pred_region
        _
      $region20: #{tpu_custom_call.1} parent=11 // pred_fallthru
        _
      // Predicated region
      $region21: #{tpu_custom_call.1} parent=11 // pred_check
        %p239 = pneg %p103
      $region22: #{tpu_custom_call.1} parent=11 // pred_check_branch
        %241 = sbr.rel (%p239) target = $region24
      $region23: #{tpu_custom_call.1} parent=11 // pred_region
        _
      $region24: #{tpu_custom_call.1} parent=11 // pred_fallthru
        _
      // Predicated region
      $region25: #{tpu_custom_call.1} parent=11 // pred_check
        %p242 = pneg %p124
      $region26: #{tpu_custom_call.1} parent=11 // pred_check_branch
        %244 = sbr.rel (%p242) target = $region28
      $region27: #{tpu_custom_call.1} parent=11 // pred_region
        _
      $region28: #{tpu_custom_call.1} parent=11 // pred_fallthru
        _
      // Predicated region
      $region29: #{tpu_custom_call.1} parent=11 // pred_check
        %p245 = pneg %p145
      $region30: #{tpu_custom_call.1} parent=11 // pred_check_branch
        %247 = sbr.rel (%p245) target = $region32
      $region31: #{tpu_custom_call.1} parent=11 // pred_region
        _
      $region32: #{tpu_custom_call.1} parent=11 // pred_fallthru
        _
      // Predicated region
      $region33: #{tpu_custom_call.1} parent=11 // pred_check
        %p248 = pneg %p166
      $region34: #{tpu_custom_call.1} parent=11 // pred_check_branch
        %250 = sbr.rel (%p248) target = $region36
      $region35: #{tpu_custom_call.1} parent=11 // pred_region
        _
      $region36: #{tpu_custom_call.1} parent=11 // pred_fallthru
        _
    $region12: #{tpu_custom_call.1} parent=5 // pred_fallthru
      _
    %p251 = scmp.lt.s32.totalorder %s14, 2
    // Predicated region
    $region37: #{tpu_custom_call.1} parent=5 // pred_check
      %p252 = pneg %p251
    $region38: #{tpu_custom_call.1} parent=5 // pred_check_branch
      %254 = sbr.rel (%p252) target = $region40
    $region39: #{tpu_custom_call.1} parent=5 // pred_region
      // Predicated region
      $region41: #{tpu_custom_call.1} parent=39 // pred_check
        %p255 = pneg %p34
      $region42: #{tpu_custom_call.1} parent=39 // pred_check_branch
        %257 = sbr.rel (%p255) target = $region44
      $region43: #{tpu_custom_call.1} parent=39 // pred_region
        %s258 = smul.u32 32, %s14
        %p259 = scmp.lt.s32.totalorder %s258, 63
        %s260 = scalar_select %p259, %s258, 63
        %s261 = smul.addr %s260, 4
        %s262 = scalar_lea.vmem %s0, %s261
        %s263 = smul.u32 32, %s14
      $region44: #{tpu_custom_call.1} parent=39 // pred_fallthru
        _
      // Predicated region
      $region45: #{tpu_custom_call.1} parent=39 // pred_check
        %p264 = pneg %p186
      $region46: #{tpu_custom_call.1} parent=39 // pred_check_branch
        %266 = sbr.rel (%p264) target = $region48
      $region47: #{tpu_custom_call.1} parent=39 // pred_region
        %s267 = smul.u32 32, %s14
        %p268 = scmp.lt.s32.totalorder %s267, 63
        %s269 = scalar_select %p268, %s267, 63
        %s270 = smul.addr %s269, 8
        %s271 = scalar_lea.vmem %s7, %s270
        %s272 = smul.u32 32, %s14
      $region48: #{tpu_custom_call.1} parent=39 // pred_fallthru
        _
    $region40: #{tpu_custom_call.1} parent=5 // pred_fallthru
      _
    %p273 = scmp.le.s32.totalorder 1, %s14
    %p274 = scmp.lt.s32.totalorder %s14, 3
    %p275 = pnand %p273, %p274
    %p276 = pneg %p275
    // Predicated region
    $region49: #{tpu_custom_call.1} parent=5 // pred_check
      _
    $region50: #{tpu_custom_call.1} parent=5 // pred_check_branch
      %278 = sbr.rel (%p275) target = $region52
    $region51: #{tpu_custom_call.1} parent=5 // pred_region
      %s279 = ssub.s32 %s14, 1
      %s280 = smul.u32 32, %s19
      %p281 = scmp.lt.s32.totalorder %s280, 63
      %s282 = scalar_select %p281, %s280, 63
      %s283 = smul.addr %s282, 4
      %s284 = scalar_lea.vmem %s0, %s283
      %p285 = pneg %p40
      %p286 = pneg %p37
      %p287 = pneg %p61
      %p288 = pneg %p58
      %p289 = pneg %p82
      %p290 = pneg %p79
      %p291 = pneg %p103
      %p292 = pneg %p100
      %p293 = pneg %p124
      %p294 = pneg %p121
      %p295 = pneg %p145
      %p296 = pneg %p142
      %p297 = pneg %p166
      %p298 = pneg %p163
      %s299 = smul.u32 32, %s19
      %p300 = scmp.lt.s32.totalorder %s299, 63
      %s301 = scalar_select %p300, %s299, 63
      %s302 = smul.addr %s301, 8
      %s303 = scalar_lea.vmem %s7, %s302
      %p304 = pneg %p192
      %p305 = pneg %p189
      %p306 = pneg %p218
      %p307 = pneg %p215
      %s308 = smul.u32 32, %s19
      %p309 = scmp.lt.s32.totalorder %s308, 63
      %s310 = scalar_select %p309, %s308, 63
      %s311 = smul.addr %s310, 8
      %s312 = scalar_lea.vmem %s8, %s311
      %s313 = smul.u32 32, %s19
      %p314 = scmp.lt.s32.totalorder %s313, 63
      %s315 = scalar_select %p314, %s313, 63
      %s316 = smul.addr %s315, 4
      %s317 = scalar_lea.vmem %s0, %s316
      %s318 = smul.u32 32, %s19
      %s319 = smul.u32 32, %s19
      %p320 = scmp.lt.s32.totalorder %s319, 63
      %s321 = scalar_select %p320, %s319, 63
      %s322 = smul.addr %s321, 8
      %s323 = scalar_lea.vmem %s7, %s322
      %s324 = smul.u32 32, %s19
      %s325 = smul.u32 32, %s19
      %p326 = scmp.lt.s32.totalorder %s325, 63
      %s327 = scalar_select %p326, %s325, 63
      %s328 = smul.addr %s327, 8
      %s329 = scalar_lea.vmem %s8, %s328
      %s330 = smul.u32 32, %s19
      %v332 = vld [vmem:[%s317] sm:$0xf]
      %v333 = vld [vmem:[%s317 + $0x4] sm:$0xf]
      %v334 = vld [vmem:[%s317 + $0x8] sm:$0xf]
      %v335 = vld [vmem:[%s317 + $0xc] sm:$0xf]
      %v336 = vld [vmem:[%s317 + $0x10] sm:$0xf]
      %v337 = vld [vmem:[%s317 + $0x14] sm:$0xf]
      %v338 = vld [vmem:[%s317 + $0x18] sm:$0xf]
      %v339 = vld [vmem:[%s317 + $0x1c] sm:$0xf]
      %v340 = vld [vmem:[%s317 + $0x20] sm:$0xf]
      %v341 = vld [vmem:[%s317 + $0x24] sm:$0xf]
      %v342 = vld [vmem:[%s317 + $0x28] sm:$0xf]
      %v343 = vld [vmem:[%s317 + $0x2c] sm:$0xf]
      %v344 = vld [vmem:[%s317 + $0x30] sm:$0xf]
      %v345 = vld [vmem:[%s317 + $0x34] sm:$0xf]
      %v346 = vld [vmem:[%s317 + $0x38] sm:$0xf]
      %v347 = vld [vmem:[%s317 + $0x3c] sm:$0xf]
      %v348 = vld [vmem:[%s317 + $0x40] sm:$0xf]
      %v349 = vld [vmem:[%s317 + $0x44] sm:$0xf]
      %v350 = vld [vmem:[%s317 + $0x48] sm:$0xf]
      %v351 = vld [vmem:[%s317 + $0x4c] sm:$0xf]
      %v352 = vld [vmem:[%s317 + $0x50] sm:$0xf]
      %v353 = vld [vmem:[%s317 + $0x54] sm:$0xf]
      %v354 = vld [vmem:[%s317 + $0x58] sm:$0xf]
      %v355 = vld [vmem:[%s317 + $0x5c] sm:$0xf]
      %v356 = vld [vmem:[%s317 + $0x60] sm:$0xf]
      %v357 = vld [vmem:[%s317 + $0x64] sm:$0xf]
      %v358 = vld [vmem:[%s317 + $0x68] sm:$0xf]
      %v359 = vld [vmem:[%s317 + $0x6c] sm:$0xf]
      %v360 = vld [vmem:[%s317 + $0x70] sm:$0xf]
      %v361 = vld [vmem:[%s317 + $0x74] sm:$0xf]
      %v362 = vld [vmem:[%s317 + $0x78] sm:$0xf]
      %v363 = vld [vmem:[%s317 + $0x7c] sm:$0xf]
      %v364 = vld [vmem:[%s1] sm:$0xf]
      %v365 = vld [vmem:[%s1 + $0x4] sm:$0xf]
      %v366 = vld [vmem:[%s1 + $0x8] sm:$0xf]
      %v367 = vld [vmem:[%s1 + $0xc] sm:$0xf]
      %v368 = vld [vmem:[%s2] sm:$0x1]
      %v370 = vlaneseq
      %v371 = vshrl.u32 %v370, 7
      %v372 = vsub.s32 0, %v371
      %v373 = vrot.slane %v368, %v372
      %v407 = vunpack.c.l.b16 %v332
      %v408 = vunpack.c.l.b16 %v333
      %v409 = vunpack.c.l.b16 %v334
      %v410 = vunpack.c.l.b16 %v335
      %v411 = vunpack.c.l.b16 %v336
      %v412 = vunpack.c.l.b16 %v337
      %v413 = vunpack.c.l.b16 %v338
      %v414 = vunpack.c.l.b16 %v339
      %v415 = vunpack.c.l.b16 %v340
      %v416 = vunpack.c.l.b16 %v341
      %v417 = vunpack.c.l.b16 %v342
      %v418 = vunpack.c.l.b16 %v343
      %v419 = vunpack.c.l.b16 %v344
      %v420 = vunpack.c.l.b16 %v345
      %v421 = vunpack.c.l.b16 %v346
      %v422 = vunpack.c.l.b16 %v347
      %v423 = vunpack.c.l.b16 %v348
      %v424 = vunpack.c.l.b16 %v349
      %v425 = vunpack.c.l.b16 %v350
      %v426 = vunpack.c.l.b16 %v351
      %v427 = vunpack.c.l.b16 %v352
      %v428 = vunpack.c.l.b16 %v353
      %v429 = vunpack.c.l.b16 %v354
      %v430 = vunpack.c.l.b16 %v355
      %v431 = vunpack.c.l.b16 %v356
      %v432 = vunpack.c.l.b16 %v357
      %v433 = vunpack.c.l.b16 %v358
      %v434 = vunpack.c.l.b16 %v359
      %v435 = vunpack.c.l.b16 %v360
      %v436 = vunpack.c.l.b16 %v361
      %v437 = vunpack.c.l.b16 %v362
      %v438 = vunpack.c.l.b16 %v363
      %v439 = vpack.c.b16 %v408, %v407
      %v440 = vpack.c.b16 %v410, %v409
      %v441 = vpack.c.b16 %v412, %v411
      %v442 = vpack.c.b16 %v414, %v413
      %v443 = vpack.c.b16 %v416, %v415
      %v444 = vpack.c.b16 %v418, %v417
      %v445 = vpack.c.b16 %v420, %v419
      %v446 = vpack.c.b16 %v422, %v421
      %v447 = vpack.c.b16 %v424, %v423
      %v448 = vpack.c.b16 %v426, %v425
      %v449 = vpack.c.b16 %v428, %v427
      %v450 = vpack.c.b16 %v430, %v429
      %v451 = vpack.c.b16 %v432, %v431
      %v452 = vpack.c.b16 %v434, %v433
      %v453 = vpack.c.b16 %v436, %v435
      %v454 = vpack.c.b16 %v438, %v437
      %v459 = vunpack.c.l.b16 %v364
      %v460 = vunpack.c.l.b16 %v365
      %v461 = vunpack.c.l.b16 %v366
      %v462 = vunpack.c.l.b16 %v367
      %v463 = vpack.c.b16 %v460, %v459
      %v464 = vpack.c.b16 %v462, %v461
      %vm467 = vcmask 261120
      %v469 = vsel %vm467, %v439, 0
      %v472 = vsel %vm467, %v440, 0
      %v475 = vsel %vm467, %v441, 0
      %v478 = vsel %vm467, %v442, 0
      %v481 = vsel %vm467, %v443, 0
      %v484 = vsel %vm467, %v444, 0
      %v487 = vsel %vm467, %v445, 0
      %v490 = vsel %vm467, %v446, 0
      %v493 = vsel %vm467, %v447, 0
      %v496 = vsel %vm467, %v448, 0
      %v499 = vsel %vm467, %v449, 0
      %v502 = vsel %vm467, %v450, 0
      %v505 = vsel %vm467, %v451, 0
      %v508 = vsel %vm467, %v452, 0
      %v511 = vsel %vm467, %v453, 0
      %v514 = vsel %vm467, %v454, 0
      %516 = vmatprep.subr.bf16.mxu0 0
      %517 = vmatpush1.bf16.msra.mxu0 %v463
      %518 = vmatprep.subr.bf16.mxu0 0
      %519 = vmatpush1.bf16.msra.mxu0 %v464
      %520 = vmatprep.subr.bf16.mxu0 0
      %521 = vmatpush1.bf16.msra.mxu0 0
      %522 = vmatprep.subr.bf16.mxu0 0
      %523 = vmatpush1.bf16.msra.mxu0 0
      %524 = vmatprep.subr.bf16.mxu0 0
      %525 = vmatpush1.bf16.msra.mxu0 0
      %526 = vmatprep.subr.bf16.mxu0 0
      %527 = vmatpush1.bf16.msra.mxu0 0
      %528 = vmatprep.subr.bf16.mxu0 0
      %529 = vmatpush1.bf16.msra.mxu0 0
      %530 = vmatprep.subr.bf16.mxu0 0
      %531 = vmatpush1.bf16.msra.mxu0 0
      %532 = vmatprep.subr.bf16.mxu0 0
      %533 = vmatpush1.bf16.msra.mxu0 0
      %534 = vmatprep.subr.bf16.mxu0 0
      %535 = vmatpush1.bf16.msra.mxu0 0
      %536 = vmatprep.subr.bf16.mxu0 0
      %537 = vmatpush1.bf16.msra.mxu0 0
      %538 = vmatprep.subr.bf16.mxu0 0
      %539 = vmatpush1.bf16.msra.mxu0 0
      %540 = vmatprep.subr.bf16.mxu0 0
      %541 = vmatpush1.bf16.msra.mxu0 0
      %542 = vmatprep.subr.bf16.mxu0 0
      %543 = vmatpush1.bf16.msra.mxu0 0
      %544 = vmatprep.subr.bf16.mxu0 0
      %545 = vmatpush1.bf16.msra.mxu0 0
      %546 = vmatprep.subr.bf16.mxu0 0
      %547 = vmatpush1.bf16.msra.mxu0 0
      %548 = vmatprep.mubr.bf16.mxu0 0
      %549 = vmatmul.mubr.bf16.gmra.mrb[0].mxu0 %v469
      %v550 = vpop.f32.mrb[0].mxu0
      %v551 = vadd.f32 %v373, %v550
      %v552 = vpop.f32.mrb[0].mxu0
      %v553 = vpop.f32.mrb[0].mxu0
      %v554 = vadd.f32 %v373, %v553
      %v555 = vpop.f32.mrb[0].mxu0
      %556 = vmatprep.mubr.bf16.mxu0 0
      %557 = vmatmul.mubr.bf16.gmra.mrb[0].mxu0 %v472
      %v558 = vpop.f32.mrb[0].mxu0
      %v559 = vadd.f32 %v373, %v558
      %v560 = vpop.f32.mrb[0].mxu0
      %v561 = vpop.f32.mrb[0].mxu0
      %v562 = vadd.f32 %v373, %v561
      %v563 = vpop.f32.mrb[0].mxu0
      %564 = vmatprep.mubr.bf16.mxu0 0
      %565 = vmatmul.mubr.bf16.gmra.mrb[0].mxu0 %v475
      %v566 = vpop.f32.mrb[0].mxu0
      %v567 = vadd.f32 %v373, %v566
      %v568 = vpop.f32.mrb[0].mxu0
      %v569 = vpop.f32.mrb[0].mxu0
      %v570 = vadd.f32 %v373, %v569
      %v571 = vpop.f32.mrb[0].mxu0
      %572 = vmatprep.mubr.bf16.mxu0 0
      %573 = vmatmul.mubr.bf16.gmra.mrb[0].mxu0 %v478
      %v574 = vpop.f32.mrb[0].mxu0
      %v575 = vadd.f32 %v373, %v574
      %v576 = vpop.f32.mrb[0].mxu0
      %v577 = vpop.f32.mrb[0].mxu0
      %v578 = vadd.f32 %v373, %v577
      %v579 = vpop.f32.mrb[0].mxu0
      %580 = vmatprep.mubr.bf16.mxu0 0
      %581 = vmatmul.mubr.bf16.gmra.mrb[0].mxu0 %v481
      %v582 = vpop.f32.mrb[0].mxu0
      %v583 = vadd.f32 %v373, %v582
      %v584 = vpop.f32.mrb[0].mxu0
      %v585 = vpop.f32.mrb[0].mxu0
      %v586 = vadd.f32 %v373, %v585
      %v587 = vpop.f32.mrb[0].mxu0
      %588 = vmatprep.mubr.bf16.mxu0 0
      %589 = vmatmul.mubr.bf16.gmra.mrb[0].mxu0 %v484
      %v590 = vpop.f32.mrb[0].mxu0
      %v591 = vadd.f32 %v373, %v590
      %v592 = vpop.f32.mrb[0].mxu0
      %v593 = vpop.f32.mrb[0].mxu0
      %v594 = vadd.f32 %v373, %v593
      %v595 = vpop.f32.mrb[0].mxu0
      %596 = vmatprep.mubr.bf16.mxu0 0
      %597 = vmatmul.mubr.bf16.gmra.mrb[0].mxu0 %v487
      %v598 = vpop.f32.mrb[0].mxu0
      %v599 = vadd.f32 %v373, %v598
      %v600 = vpop.f32.mrb[0].mxu0
      %v601 = vpop.f32.mrb[0].mxu0
      %v602 = vadd.f32 %v373, %v601
      %v603 = vpop.f32.mrb[0].mxu0
      %604 = vmatprep.mubr.bf16.mxu0 0
      %605 = vmatmul.mubr.bf16.gmra.mrb[0].mxu0 %v490
      %v606 = vpop.f32.mrb[0].mxu0
      %v607 = vadd.f32 %v373, %v606
      %v608 = vpop.f32.mrb[0].mxu0
      %v609 = vpop.f32.mrb[0].mxu0
      %v610 = vadd.f32 %v373, %v609
      %v611 = vpop.f32.mrb[0].mxu0
      %612 = vmatprep.mubr.bf16.mxu0 0
      %613 = vmatmul.mubr.bf16.gmra.mrb[0].mxu0 %v493
      %v614 = vpop.f32.mrb[0].mxu0
      %v615 = vadd.f32 %v373, %v614
      %v616 = vpop.f32.mrb[0].mxu0
      %v617 = vpop.f32.mrb[0].mxu0
      %v618 = vadd.f32 %v373, %v617
      %v619 = vpop.f32.mrb[0].mxu0
      %620 = vmatprep.mubr.bf16.mxu0 0
      %621 = vmatmul.mubr.bf16.gmra.mrb[0].mxu0 %v496
      %v622 = vpop.f32.mrb[0].mxu0
      %v623 = vadd.f32 %v373, %v622
      %v624 = vpop.f32.mrb[0].mxu0
      %v625 = vpop.f32.mrb[0].mxu0
      %v626 = vadd.f32 %v373, %v625
      %v627 = vpop.f32.mrb[0].mxu0
      %628 = vmatprep.mubr.bf16.mxu0 0
      %629 = vmatmul.mubr.bf16.gmra.mrb[0].mxu0 %v499
      %v630 = vpop.f32.mrb[0].mxu0
      %v631 = vadd.f32 %v373, %v630
      %v632 = vpop.f32.mrb[0].mxu0
      %v633 = vpop.f32.mrb[0].mxu0
      %v634 = vadd.f32 %v373, %v633
      %v635 = vpop.f32.mrb[0].mxu0
      %636 = vmatprep.mubr.bf16.mxu0 0
      %637 = vmatmul.mubr.bf16.gmra.mrb[0].mxu0 %v502
      %v638 = vpop.f32.mrb[0].mxu0
      %v639 = vadd.f32 %v373, %v638
      %v640 = vpop.f32.mrb[0].mxu0
      %v641 = vpop.f32.mrb[0].mxu0
      %v642 = vadd.f32 %v373, %v641
      %v643 = vpop.f32.mrb[0].mxu0
      %644 = vmatprep.mubr.bf16.mxu0 0
      %645 = vmatmul.mubr.bf16.gmra.mrb[0].mxu0 %v505
      %v646 = vpop.f32.mrb[0].mxu0
      %v647 = vadd.f32 %v373, %v646
      %v648 = vpop.f32.mrb[0].mxu0
      %v649 = vpop.f32.mrb[0].mxu0
      %v650 = vadd.f32 %v373, %v649
      %v651 = vpop.f32.mrb[0].mxu0
      %652 = vmatprep.mubr.bf16.mxu0 0
      %653 = vmatmul.mubr.bf16.gmra.mrb[0].mxu0 %v508
      %v654 = vpop.f32.mrb[0].mxu0
      %v655 = vadd.f32 %v373, %v654
      %v656 = vpop.f32.mrb[0].mxu0
      %v657 = vpop.f32.mrb[0].mxu0
      %v658 = vadd.f32 %v373, %v657
      %v659 = vpop.f32.mrb[0].mxu0
      %660 = vmatprep.mubr.bf16.mxu0 0
      %661 = vmatmul.mubr.bf16.gmra.mrb[0].mxu0 %v511
      %v662 = vpop.f32.mrb[0].mxu0
      %v663 = vadd.f32 %v373, %v662
      %v664 = vpop.f32.mrb[0].mxu0
      %v665 = vpop.f32.mrb[0].mxu0
      %v666 = vadd.f32 %v373, %v665
      %v667 = vpop.f32.mrb[0].mxu0
      %668 = vmatprep.mubr.bf16.mxu0 0
      %669 = vmatmul.mubr.bf16.gmra.mrb[0].mxu0 %v514
      %v670 = vpop.f32.mrb[0].mxu0
      %v671 = vadd.f32 %v373, %v670
      %v672 = vpop.f32.mrb[0].mxu0
      %v673 = vpop.f32.mrb[0].mxu0
      %v674 = vadd.f32 %v373, %v673
      %v675 = vpop.f32.mrb[0].mxu0
      %676 = vdwg.mxu0
      %v677 = vmax.f32 %v551, 0.0
      %v678 = vmax.f32 %v554, 0.0
      %v679 = vmax.f32 %v559, 0.0
      %v680 = vmax.f32 %v562, 0.0
      %v681 = vmax.f32 %v567, 0.0
      %v682 = vmax.f32 %v570, 0.0
      %v683 = vmax.f32 %v575, 0.0
      %v684 = vmax.f32 %v578, 0.0
      %v685 = vmax.f32 %v583, 0.0
      %v686 = vmax.f32 %v586, 0.0
      %v687 = vmax.f32 %v591, 0.0
      %v688 = vmax.f32 %v594, 0.0
      %v689 = vmax.f32 %v599, 0.0
      %v690 = vmax.f32 %v602, 0.0
      %v691 = vmax.f32 %v607, 0.0
      %v692 = vmax.f32 %v610, 0.0
      %v693 = vmax.f32 %v615, 0.0
      %v694 = vmax.f32 %v618, 0.0
      %v695 = vmax.f32 %v623, 0.0
      %v696 = vmax.f32 %v626, 0.0
      %v697 = vmax.f32 %v631, 0.0
      %v698 = vmax.f32 %v634, 0.0
      %v699 = vmax.f32 %v639, 0.0
      %v700 = vmax.f32 %v642, 0.0
      %v701 = vmax.f32 %v647, 0.0
      %v702 = vmax.f32 %v650, 0.0
      %v703 = vmax.f32 %v655, 0.0
      %v704 = vmax.f32 %v658, 0.0
      %v705 = vmax.f32 %v663, 0.0
      %v706 = vmax.f32 %v666, 0.0
      %v707 = vmax.f32 %v671, 0.0
      %v708 = vmax.f32 %v674, 0.0
      %v709 = vpack.c.bf16 %v678, %v677
      %v710 = vpack.c.bf16 %v680, %v679
      %v711 = vpack.c.bf16 %v682, %v681
      %v712 = vpack.c.bf16 %v684, %v683
      %v713 = vpack.c.bf16 %v686, %v685
      %v714 = vpack.c.bf16 %v688, %v687
      %v715 = vpack.c.bf16 %v690, %v689
      %v716 = vpack.c.bf16 %v692, %v691
      %v717 = vpack.c.bf16 %v694, %v693
      %v718 = vpack.c.bf16 %v696, %v695
      %v719 = vpack.c.bf16 %v698, %v697
      %v720 = vpack.c.bf16 %v700, %v699
      %v721 = vpack.c.bf16 %v702, %v701
      %v722 = vpack.c.bf16 %v704, %v703
      %v723 = vpack.c.bf16 %v706, %v705
      %v724 = vpack.c.bf16 %v708, %v707
      %v725 = vld [vmem:[%s3] sm:$0xf]
      %v726 = vld [vmem:[%s3 + $0x4] sm:$0xf]
      %v727 = vld [vmem:[%s3 + $0x8] sm:$0xf]
      %v728 = vld [vmem:[%s3 + $0xc] sm:$0xf]
      %v729 = vld [vmem:[%s3 + $0x10] sm:$0xf]
      %v730 = vld [vmem:[%s3 + $0x14] sm:$0xf]
      %v731 = vld [vmem:[%s3 + $0x18] sm:$0xf]
      %v732 = vld [vmem:[%s3 + $0x1c] sm:$0xf]
      %v733 = vld [vmem:[%s3 + $0x20] sm:$0xf]
      %v734 = vld [vmem:[%s3 + $0x24] sm:$0xf]
      %v735 = vld [vmem:[%s3 + $0x28] sm:$0xf]
      %v736 = vld [vmem:[%s3 + $0x2c] sm:$0xf]
      %v737 = vld [vmem:[%s3 + $0x30] sm:$0xf]
      %v738 = vld [vmem:[%s3 + $0x34] sm:$0xf]
      %v739 = vld [vmem:[%s3 + $0x38] sm:$0xf]
      %v740 = vld [vmem:[%s3 + $0x3c] sm:$0xf]
      %v741 = vld [vmem:[%s4] sm:$0x1]
      %v743 = vlaneseq
      %v744 = vshrl.u32 %v743, 7
      %v745 = vsub.s32 0, %v744
      %v746 = vrot.slane %v741, %v745
      %v764 = vunpack.c.l.b16 %v725
      %v765 = vunpack.c.l.b16 %v726
      %v766 = vunpack.c.l.b16 %v727
      %v767 = vunpack.c.l.b16 %v728
      %v768 = vunpack.c.l.b16 %v729
      %v769 = vunpack.c.l.b16 %v730
      %v770 = vunpack.c.l.b16 %v731
      %v771 = vunpack.c.l.b16 %v732
      %v772 = vunpack.c.l.b16 %v733
      %v773 = vunpack.c.l.b16 %v734
      %v774 = vunpack.c.l.b16 %v735
      %v775 = vunpack.c.l.b16 %v736
      %v776 = vunpack.c.l.b16 %v737
      %v777 = vunpack.c.l.b16 %v738
      %v778 = vunpack.c.l.b16 %v739
      %v779 = vunpack.c.l.b16 %v740
      %v780 = vpack.c.b16 %v765, %v764
      %v781 = vpack.c.b16 %v767, %v766
      %v782 = vpack.c.b16 %v769, %v768
      %v783 = vpack.c.b16 %v771, %v770
      %v784 = vpack.c.b16 %v773, %v772
      %v785 = vpack.c.b16 %v775, %v774
      %v786 = vpack.c.b16 %v777, %v776
      %v787 = vpack.c.b16 %v779, %v778
      %796 = vmatprep.subr.bf16.mxu0 0
      %797 = vmatpush1.bf16.msra.mxu0 %v780
      %798 = vmatprep.subr.bf16.mxu0 0
      %799 = vmatpush1.bf16.msra.mxu0 %v781
      %800 = vmatprep.subr.bf16.mxu0 0
      %801 = vmatpush1.bf16.msra.mxu0 %v782
      %802 = vmatprep.subr.bf16.mxu0 0
      %803 = vmatpush1.bf16.msra.mxu0 %v783
      %804 = vmatprep.subr.bf16.mxu0 0
      %805 = vmatpush1.bf16.msra.mxu0 %v784
      %806 = vmatprep.subr.bf16.mxu0 0
      %807 = vmatpush1.bf16.msra.mxu0 %v785
      %808 = vmatprep.subr.bf16.mxu0 0
      %809 = vmatpush1.bf16.msra.mxu0 %v786
      %810 = vmatprep.subr.bf16.mxu0 0
      %811 = vmatpush1.bf16.msra.mxu0 %v787
      %812 = vmatprep.subr.bf16.mxu0 0
      %813 = vmatpush1.bf16.msra.mxu0 0
      %814 = vmatprep.subr.bf16.mxu0 0
      %815 = vmatpush1.bf16.msra.mxu0 0
      %816 = vmatprep.subr.bf16.mxu0 0
      %817 = vmatpush1.bf16.msra.mxu0 0
      %818 = vmatprep.subr.bf16.mxu0 0
      %819 = vmatpush1.bf16.msra.mxu0 0
      %820 = vmatprep.subr.bf16.mxu0 0
      %821 = vmatpush1.bf16.msra.mxu0 0
      %822 = vmatprep.subr.bf16.mxu0 0
      %823 = vmatpush1.bf16.msra.mxu0 0
      %824 = vmatprep.subr.bf16.mxu0 0
      %825 = vmatpush1.bf16.msra.mxu0 0
      %826 = vmatprep.subr.bf16.mxu0 0
      %827 = vmatpush1.bf16.msra.mxu0 0
      %828 = vmatprep.mubr.bf16.mxu0 0
      %829 = vmatmul.mubr.bf16.gmra.mrb[0].mxu0 %v709
      %v830 = vpop.f32.mrb[0].mxu0
      %v831 = vadd.f32 %v746, %v830
      %v832 = vpop.f32.mrb[0].mxu0
      %v833 = vpop.f32.mrb[0].mxu0
      %v834 = vadd.f32 %v746, %v833
      %v835 = vpop.f32.mrb[0].mxu0
      %836 = vmatprep.mubr.bf16.mxu0 0
      %837 = vmatmul.mubr.bf16.gmra.mrb[0].mxu0 %v710
      %v838 = vpop.f32.mrb[0].mxu0
      %v839 = vadd.f32 %v746, %v838
      %v840 = vpop.f32.mrb[0].mxu0
      %v841 = vpop.f32.mrb[0].mxu0
      %v842 = vadd.f32 %v746, %v841
      %v843 = vpop.f32.mrb[0].mxu0
      %844 = vmatprep.mubr.bf16.mxu0 0
      %845 = vmatmul.mubr.bf16.gmra.mrb[0].mxu0 %v711
      %v846 = vpop.f32.mrb[0].mxu0
      %v847 = vadd.f32 %v746, %v846
      %v848 = vpop.f32.mrb[0].mxu0
      %v849 = vpop.f32.mrb[0].mxu0
      %v850 = vadd.f32 %v746, %v849
      %v851 = vpop.f32.mrb[0].mxu0
      %852 = vmatprep.mubr.bf16.mxu0 0
      %853 = vmatmul.mubr.bf16.gmra.mrb[0].mxu0 %v712
      %v854 = vpop.f32.mrb[0].mxu0
      %v855 = vadd.f32 %v746, %v854
      %v856 = vpop.f32.mrb[0].mxu0
      %v857 = vpop.f32.mrb[0].mxu0
      %v858 = vadd.f32 %v746, %v857
      %v859 = vpop.f32.mrb[0].mxu0
      %860 = vmatprep.mubr.bf16.mxu0 0
      %861 = vmatmul.mubr.bf16.gmra.mrb[0].mxu0 %v713
      %v862 = vpop.f32.mrb[0].mxu0
      %v863 = vadd.f32 %v746, %v862
      %v864 = vpop.f32.mrb[0].mxu0
      %v865 = vpop.f32.mrb[0].mxu0
      %v866 = vadd.f32 %v746, %v865
      %v867 = vpop.f32.mrb[0].mxu0
      %868 = vmatprep.mubr.bf16.mxu0 0
      %869 = vmatmul.mubr.bf16.gmra.mrb[0].mxu0 %v714
      %v870 = vpop.f32.mrb[0].mxu0
      %v871 = vadd.f32 %v746, %v870
      %v872 = vpop.f32.mrb[0].mxu0
      %v873 = vpop.f32.mrb[0].mxu0
      %v874 = vadd.f32 %v746, %v873
      %v875 = vpop.f32.mrb[0].mxu0
      %876 = vmatprep.mubr.bf16.mxu0 0
      %877 = vmatmul.mubr.bf16.gmra.mrb[0].mxu0 %v715
      %v878 = vpop.f32.mrb[0].mxu0
      %v879 = vadd.f32 %v746, %v878
      %v880 = vpop.f32.mrb[0].mxu0
      %v881 = vpop.f32.mrb[0].mxu0
      %v882 = vadd.f32 %v746, %v881
      %v883 = vpop.f32.mrb[0].mxu0
      %884 = vmatprep.mubr.bf16.mxu0 0
      %885 = vmatmul.mubr.bf16.gmra.mrb[0].mxu0 %v716
      %v886 = vpop.f32.mrb[0].mxu0
      %v887 = vadd.f32 %v746, %v886
      %v888 = vpop.f32.mrb[0].mxu0
      %v889 = vpop.f32.mrb[0].mxu0
      %v890 = vadd.f32 %v746, %v889
      %v891 = vpop.f32.mrb[0].mxu0
      %892 = vmatprep.mubr.bf16.mxu0 0
      %893 = vmatmul.mubr.bf16.gmra.mrb[0].mxu0 %v717
      %v894 = vpop.f32.mrb[0].mxu0
      %v895 = vadd.f32 %v746, %v894
      %v896 = vpop.f32.mrb[0].mxu0
      %v897 = vpop.f32.mrb[0].mxu0
      %v898 = vadd.f32 %v746, %v897
      %v899 = vpop.f32.mrb[0].mxu0
      %900 = vmatprep.mubr.bf16.mxu0 0
      %901 = vmatmul.mubr.bf16.gmra.mrb[0].mxu0 %v718
      %v902 = vpop.f32.mrb[0].mxu0
      %v903 = vadd.f32 %v746, %v902
      %v904 = vpop.f32.mrb[0].mxu0
      %v905 = vpop.f32.mrb[0].mxu0
      %v906 = vadd.f32 %v746, %v905
      %v907 = vpop.f32.mrb[0].mxu0
      %908 = vmatprep.mubr.bf16.mxu0 0
      %909 = vmatmul.mubr.bf16.gmra.mrb[0].mxu0 %v719
      %v910 = vpop.f32.mrb[0].mxu0
      %v911 = vadd.f32 %v746, %v910
      %v912 = vpop.f32.mrb[0].mxu0
      %v913 = vpop.f32.mrb[0].mxu0
      %v914 = vadd.f32 %v746, %v913
      %v915 = vpop.f32.mrb[0].mxu0
      %916 = vmatprep.mubr.bf16.mxu0 0
      %917 = vmatmul.mubr.bf16.gmra.mrb[0].mxu0 %v720
      %v918 = vpop.f32.mrb[0].mxu0
      %v919 = vadd.f32 %v746, %v918
      %v920 = vpop.f32.mrb[0].mxu0
      %v921 = vpop.f32.mrb[0].mxu0
      %v922 = vadd.f32 %v746, %v921
      %v923 = vpop.f32.mrb[0].mxu0
      %924 = vmatprep.mubr.bf16.mxu0 0
      %925 = vmatmul.mubr.bf16.gmra.mrb[0].mxu0 %v721
      %v926 = vpop.f32.mrb[0].mxu0
      %v927 = vadd.f32 %v746, %v926
      %v928 = vpop.f32.mrb[0].mxu0
      %v929 = vpop.f32.mrb[0].mxu0
      %v930 = vadd.f32 %v746, %v929
      %v931 = vpop.f32.mrb[0].mxu0
      %932 = vmatprep.mubr.bf16.mxu0 0
      %933 = vmatmul.mubr.bf16.gmra.mrb[0].mxu0 %v722
      %v934 = vpop.f32.mrb[0].mxu0
      %v935 = vadd.f32 %v746, %v934
      %v936 = vpop.f32.mrb[0].mxu0
      %v937 = vpop.f32.mrb[0].mxu0
      %v938 = vadd.f32 %v746, %v937
      %v939 = vpop.f32.mrb[0].mxu0
      %940 = vmatprep.mubr.bf16.mxu0 0
      %941 = vmatmul.mubr.bf16.gmra.mrb[0].mxu0 %v723
      %v942 = vpop.f32.mrb[0].mxu0
      %v943 = vadd.f32 %v746, %v942
      %v944 = vpop.f32.mrb[0].mxu0
      %v945 = vpop.f32.mrb[0].mxu0
      %v946 = vadd.f32 %v746, %v945
      %v947 = vpop.f32.mrb[0].mxu0
      %948 = vmatprep.mubr.bf16.mxu0 0
      %949 = vmatmul.mubr.bf16.gmra.mrb[0].mxu0 %v724
      %v950 = vpop.f32.mrb[0].mxu0
      %v951 = vadd.f32 %v746, %v950
      %v952 = vpop.f32.mrb[0].mxu0
      %v953 = vpop.f32.mrb[0].mxu0
      %v954 = vadd.f32 %v746, %v953
      %v955 = vpop.f32.mrb[0].mxu0
      %956 = vdwg.mxu0
      %v957 = vmax.f32 %v831, 0.0
      %v958 = vmax.f32 %v834, 0.0
      %v959 = vmax.f32 %v839, 0.0
      %v960 = vmax.f32 %v842, 0.0
      %v961 = vmax.f32 %v847, 0.0
      %v962 = vmax.f32 %v850, 0.0
      %v963 = vmax.f32 %v855, 0.0
      %v964 = vmax.f32 %v858, 0.0
      %v965 = vmax.f32 %v863, 0.0
      %v966 = vmax.f32 %v866, 0.0
      %v967 = vmax.f32 %v871, 0.0
      %v968 = vmax.f32 %v874, 0.0
      %v969 = vmax.f32 %v879, 0.0
      %v970 = vmax.f32 %v882, 0.0
      %v971 = vmax.f32 %v887, 0.0
      %v972 = vmax.f32 %v890, 0.0
      %v973 = vmax.f32 %v895, 0.0
      %v974 = vmax.f32 %v898, 0.0
      %v975 = vmax.f32 %v903, 0.0
      %v976 = vmax.f32 %v906, 0.0
      %v977 = vmax.f32 %v911, 0.0
      %v978 = vmax.f32 %v914, 0.0
      %v979 = vmax.f32 %v919, 0.0
      %v980 = vmax.f32 %v922, 0.0
      %v981 = vmax.f32 %v927, 0.0
      %v982 = vmax.f32 %v930, 0.0
      %v983 = vmax.f32 %v935, 0.0
      %v984 = vmax.f32 %v938, 0.0
      %v985 = vmax.f32 %v943, 0.0
      %v986 = vmax.f32 %v946, 0.0
      %v987 = vmax.f32 %v951, 0.0
      %v988 = vmax.f32 %v954, 0.0
      %v989 = vpack.c.bf16 %v958, %v957
      %v990 = vpack.c.bf16 %v960, %v959
      %v991 = vpack.c.bf16 %v962, %v961
      %v992 = vpack.c.bf16 %v964, %v963
      %v993 = vpack.c.bf16 %v966, %v965
      %v994 = vpack.c.bf16 %v968, %v967
      %v995 = vpack.c.bf16 %v970, %v969
      %v996 = vpack.c.bf16 %v972, %v971
      %v997 = vpack.c.bf16 %v974, %v973
      %v998 = vpack.c.bf16 %v976, %v975
      %v999 = vpack.c.bf16 %v978, %v977
      %v1000 = vpack.c.bf16 %v980, %v979
      %v1001 = vpack.c.bf16 %v982, %v981
      %v1002 = vpack.c.bf16 %v984, %v983
      %v1003 = vpack.c.bf16 %v986, %v985
      %v1004 = vpack.c.bf16 %v988, %v987
      %v1005 = vld [vmem:[%s5] sm:$0xf]
      %v1006 = vld [vmem:[%s5 + $0x4] sm:$0xf]
      %v1007 = vld [vmem:[%s5 + $0x8] sm:$0xf]
      %v1008 = vld [vmem:[%s5 + $0xc] sm:$0xf]
      %v1009 = vld [vmem:[%s5 + $0x10] sm:$0xf]
      %v1010 = vld [vmem:[%s5 + $0x14] sm:$0xf]
      %v1011 = vld [vmem:[%s5 + $0x18] sm:$0xf]
      %v1012 = vld [vmem:[%s5 + $0x1c] sm:$0xf]
      %v1013 = vld [vmem:[%s5 + $0x20] sm:$0xf]
      %v1014 = vld [vmem:[%s5 + $0x24] sm:$0xf]
      %v1015 = vld [vmem:[%s5 + $0x28] sm:$0xf]
      %v1016 = vld [vmem:[%s5 + $0x2c] sm:$0xf]
      %v1017 = vld [vmem:[%s5 + $0x30] sm:$0xf]
      %v1018 = vld [vmem:[%s5 + $0x34] sm:$0xf]
      %v1019 = vld [vmem:[%s5 + $0x38] sm:$0xf]
      %v1020 = vld [vmem:[%s5 + $0x3c] sm:$0xf]
      %v1021 = vld [vmem:[%s6] sm:$0x1]
      %v1023 = vlaneseq
      %v1024 = vshrl.u32 %v1023, 7
      %v1025 = vsub.s32 0, %v1024
      %v1026 = vrot.slane %v1021, %v1025
      %v1044 = vunpack.c.l.b16 %v1005
      %v1045 = vunpack.c.l.b16 %v1006
      %v1046 = vunpack.c.l.b16 %v1007
      %v1047 = vunpack.c.l.b16 %v1008
      %v1048 = vunpack.c.l.b16 %v1009
      %v1049 = vunpack.c.l.b16 %v1010
      %v1050 = vunpack.c.l.b16 %v1011
      %v1051 = vunpack.c.l.b16 %v1012
      %v1052 = vunpack.c.l.b16 %v1013
      %v1053 = vunpack.c.l.b16 %v1014
      %v1054 = vunpack.c.l.b16 %v1015
      %v1055 = vunpack.c.l.b16 %v1016
      %v1056 = vunpack.c.l.b16 %v1017
      %v1057 = vunpack.c.l.b16 %v1018
      %v1058 = vunpack.c.l.b16 %v1019
      %v1059 = vunpack.c.l.b16 %v1020
      %v1060 = vpack.c.b16 %v1045, %v1044
      %v1061 = vpack.c.b16 %v1047, %v1046
      %v1062 = vpack.c.b16 %v1049, %v1048
      %v1063 = vpack.c.b16 %v1051, %v1050
      %v1064 = vpack.c.b16 %v1053, %v1052
      %v1065 = vpack.c.b16 %v1055, %v1054
      %v1066 = vpack.c.b16 %v1057, %v1056
      %v1067 = vpack.c.b16 %v1059, %v1058
      %1076 = vmatprep.subr.bf16.mxu0 0
      %1077 = vmatpush1.bf16.msra.mxu0 %v1060
      %1078 = vmatprep.subr.bf16.mxu0 0
      %1079 = vmatpush1.bf16.msra.mxu0 %v1061
      %1080 = vmatprep.subr.bf16.mxu0 0
      %1081 = vmatpush1.bf16.msra.mxu0 %v1062
      %1082 = vmatprep.subr.bf16.mxu0 0
      %1083 = vmatpush1.bf16.msra.mxu0 %v1063
      %1084 = vmatprep.subr.bf16.mxu0 0
      %1085 = vmatpush1.bf16.msra.mxu0 %v1064
      %1086 = vmatprep.subr.bf16.mxu0 0
      %1087 = vmatpush1.bf16.msra.mxu0 %v1065
      %1088 = vmatprep.subr.bf16.mxu0 0
      %1089 = vmatpush1.bf16.msra.mxu0 %v1066
      %1090 = vmatprep.subr.bf16.mxu0 0
      %1091 = vmatpush1.bf16.msra.mxu0 %v1067
      %1092 = vmatprep.subr.bf16.mxu0 0
      %1093 = vmatpush1.bf16.msra.mxu0 0
      %1094 = vmatprep.subr.bf16.mxu0 0
      %1095 = vmatpush1.bf16.msra.mxu0 0
      %1096 = vmatprep.subr.bf16.mxu0 0
      %1097 = vmatpush1.bf16.msra.mxu0 0
      %1098 = vmatprep.subr.bf16.mxu0 0
      %1099 = vmatpush1.bf16.msra.mxu0 0
      %1100 = vmatprep.subr.bf16.mxu0 0
      %1101 = vmatpush1.bf16.msra.mxu0 0
      %1102 = vmatprep.subr.bf16.mxu0 0
      %1103 = vmatpush1.bf16.msra.mxu0 0
      %1104 = vmatprep.subr.bf16.mxu0 0
      %1105 = vmatpush1.bf16.msra.mxu0 0
      %1106 = vmatprep.subr.bf16.mxu0 0
      %1107 = vmatpush1.bf16.msra.mxu0 0
      %1108 = vmatprep.mubr.bf16.mxu0 0
      %1109 = vmatmul.mubr.bf16.gmra.mrb[0].mxu0 %v989
      %v1110 = vpop.f32.mrb[0].mxu0
      %v1111 = vadd.f32 %v1026, %v1110
      %v1112 = vpop.f32.mrb[0].mxu0
      %v1113 = vpop.f32.mrb[0].mxu0
      %v1114 = vadd.f32 %v1026, %v1113
      %v1115 = vpop.f32.mrb[0].mxu0
      %1116 = vmatprep.mubr.bf16.mxu0 0
      %1117 = vmatmul.mubr.bf16.gmra.mrb[0].mxu0 %v990
      %v1118 = vpop.f32.mrb[0].mxu0
      %v1119 = vadd.f32 %v1026, %v1118
      %v1120 = vpop.f32.mrb[0].mxu0
      %v1121 = vpop.f32.mrb[0].mxu0
      %v1122 = vadd.f32 %v1026, %v1121
      %v1123 = vpop.f32.mrb[0].mxu0
      %1124 = vmatprep.mubr.bf16.mxu0 0
      %1125 = vmatmul.mubr.bf16.gmra.mrb[0].mxu0 %v991
      %v1126 = vpop.f32.mrb[0].mxu0
      %v1127 = vadd.f32 %v1026, %v1126
      %v1128 = vpop.f32.mrb[0].mxu0
      %v1129 = vpop.f32.mrb[0].mxu0
      %v1130 = vadd.f32 %v1026, %v1129
      %v1131 = vpop.f32.mrb[0].mxu0
      %1132 = vmatprep.mubr.bf16.mxu0 0
      %1133 = vmatmul.mubr.bf16.gmra.mrb[0].mxu0 %v992
      %v1134 = vpop.f32.mrb[0].mxu0
      %v1135 = vadd.f32 %v1026, %v1134
      %v1136 = vpop.f32.mrb[0].mxu0
      %v1137 = vpop.f32.mrb[0].mxu0
      %v1138 = vadd.f32 %v1026, %v1137
      %v1139 = vpop.f32.mrb[0].mxu0
      %1140 = vmatprep.mubr.bf16.mxu0 0
      %1141 = vmatmul.mubr.bf16.gmra.mrb[0].mxu0 %v993
      %v1142 = vpop.f32.mrb[0].mxu0
      %v1143 = vadd.f32 %v1026, %v1142
      %v1144 = vpop.f32.mrb[0].mxu0
      %v1145 = vpop.f32.mrb[0].mxu0
      %v1146 = vadd.f32 %v1026, %v1145
      %v1147 = vpop.f32.mrb[0].mxu0
      %1148 = vmatprep.mubr.bf16.mxu0 0
      %1149 = vmatmul.mubr.bf16.gmra.mrb[0].mxu0 %v994
      %v1150 = vpop.f32.mrb[0].mxu0
      %v1151 = vadd.f32 %v1026, %v1150
      %v1152 = vpop.f32.mrb[0].mxu0
      %v1153 = vpop.f32.mrb[0].mxu0
      %v1154 = vadd.f32 %v1026, %v1153
      %v1155 = vpop.f32.mrb[0].mxu0
      %1156 = vmatprep.mubr.bf16.mxu0 0
      %1157 = vmatmul.mubr.bf16.gmra.mrb[0].mxu0 %v995
      %v1158 = vpop.f32.mrb[0].mxu0
      %v1159 = vadd.f32 %v1026, %v1158
      %v1160 = vpop.f32.mrb[0].mxu0
      %v1161 = vpop.f32.mrb[0].mxu0
      %v1162 = vadd.f32 %v1026, %v1161
      %v1163 = vpop.f32.mrb[0].mxu0
      %1164 = vmatprep.mubr.bf16.mxu0 0
      %1165 = vmatmul.mubr.bf16.gmra.mrb[0].mxu0 %v996
      %v1166 = vpop.f32.mrb[0].mxu0
      %v1167 = vadd.f32 %v1026, %v1166
      %v1168 = vpop.f32.mrb[0].mxu0
      %v1169 = vpop.f32.mrb[0].mxu0
      %v1170 = vadd.f32 %v1026, %v1169
      %v1171 = vpop.f32.mrb[0].mxu0
      %1172 = vmatprep.mubr.bf16.mxu0 0
      %1173 = vmatmul.mubr.bf16.gmra.mrb[0].mxu0 %v997
      %v1174 = vpop.f32.mrb[0].mxu0
      %v1175 = vadd.f32 %v1026, %v1174
      %v1176 = vpop.f32.mrb[0].mxu0
      %v1177 = vpop.f32.mrb[0].mxu0
      %v1178 = vadd.f32 %v1026, %v1177
      %v1179 = vpop.f32.mrb[0].mxu0
      %1180 = vmatprep.mubr.bf16.mxu0 0
      %1181 = vmatmul.mubr.bf16.gmra.mrb[0].mxu0 %v998
      %v1182 = vpop.f32.mrb[0].mxu0
      %v1183 = vadd.f32 %v1026, %v1182
      %v1184 = vpop.f32.mrb[0].mxu0
      %v1185 = vpop.f32.mrb[0].mxu0
      %v1186 = vadd.f32 %v1026, %v1185
      %v1187 = vpop.f32.mrb[0].mxu0
      %1188 = vmatprep.mubr.bf16.mxu0 0
      %1189 = vmatmul.mubr.bf16.gmra.mrb[0].mxu0 %v999
      %v1190 = vpop.f32.mrb[0].mxu0
      %v1191 = vadd.f32 %v1026, %v1190
      %v1192 = vpop.f32.mrb[0].mxu0
      %v1193 = vpop.f32.mrb[0].mxu0
      %v1194 = vadd.f32 %v1026, %v1193
      %v1195 = vpop.f32.mrb[0].mxu0
      %1196 = vmatprep.mubr.bf16.mxu0 0
      %1197 = vmatmul.mubr.bf16.gmra.mrb[0].mxu0 %v1000
      %v1198 = vpop.f32.mrb[0].mxu0
      %v1199 = vadd.f32 %v1026, %v1198
      %v1200 = vpop.f32.mrb[0].mxu0
      %v1201 = vpop.f32.mrb[0].mxu0
      %v1202 = vadd.f32 %v1026, %v1201
      %v1203 = vpop.f32.mrb[0].mxu0
      %1204 = vmatprep.mubr.bf16.mxu0 0
      %1205 = vmatmul.mubr.bf16.gmra.mrb[0].mxu0 %v1001
      %v1206 = vpop.f32.mrb[0].mxu0
      %v1207 = vadd.f32 %v1026, %v1206
      %v1208 = vpop.f32.mrb[0].mxu0
      %v1209 = vpop.f32.mrb[0].mxu0
      %v1210 = vadd.f32 %v1026, %v1209
      %v1211 = vpop.f32.mrb[0].mxu0
      %1212 = vmatprep.mubr.bf16.mxu0 0
      %1213 = vmatmul.mubr.bf16.gmra.mrb[0].mxu0 %v1002
      %v1214 = vpop.f32.mrb[0].mxu0
      %v1215 = vadd.f32 %v1026, %v1214
      %v1216 = vpop.f32.mrb[0].mxu0
      %v1217 = vpop.f32.mrb[0].mxu0
      %v1218 = vadd.f32 %v1026, %v1217
      %v1219 = vpop.f32.mrb[0].mxu0
      %1220 = vmatprep.mubr.bf16.mxu0 0
      %1221 = vmatmul.mubr.bf16.gmra.mrb[0].mxu0 %v1003
      %v1222 = vpop.f32.mrb[0].mxu0
      %v1223 = vadd.f32 %v1026, %v1222
      %v1224 = vpop.f32.mrb[0].mxu0
      %v1225 = vpop.f32.mrb[0].mxu0
      %v1226 = vadd.f32 %v1026, %v1225
      %v1227 = vpop.f32.mrb[0].mxu0
      %1228 = vmatprep.mubr.bf16.mxu0 0
      %1229 = vmatmul.mubr.bf16.gmra.mrb[0].mxu0 %v1004
      %v1230 = vpop.f32.mrb[0].mxu0
      %v1231 = vadd.f32 %v1026, %v1230
      %v1232 = vpop.f32.mrb[0].mxu0
      %v1233 = vpop.f32.mrb[0].mxu0
      %v1234 = vadd.f32 %v1026, %v1233
      %v1235 = vpop.f32.mrb[0].mxu0
      %1236 = vdwg.mxu0
      %v1237 = vtanh.pop %v1111
      %v1238 = vtanh.pop %v1114
      %v1239 = vtanh.pop %v1119
      %v1240 = vtanh.pop %v1122
      %v1241 = vtanh.pop %v1127
      %v1242 = vtanh.pop %v1130
      %v1243 = vtanh.pop %v1135
      %v1244 = vtanh.pop %v1138
      %v1245 = vtanh.pop %v1143
      %v1246 = vtanh.pop %v1146
      %v1247 = vtanh.pop %v1151
      %v1248 = vtanh.pop %v1154
      %v1249 = vtanh.pop %v1159
      %v1250 = vtanh.pop %v1162
      %v1251 = vtanh.pop %v1167
      %v1252 = vtanh.pop %v1170
      %v1253 = vtanh.pop %v1175
      %v1254 = vtanh.pop %v1178
      %v1255 = vtanh.pop %v1183
      %v1256 = vtanh.pop %v1186
      %v1257 = vtanh.pop %v1191
      %v1258 = vtanh.pop %v1194
      %v1259 = vtanh.pop %v1199
      %v1260 = vtanh.pop %v1202
      %v1261 = vtanh.pop %v1207
      %v1262 = vtanh.pop %v1210
      %v1263 = vtanh.pop %v1215
      %v1264 = vtanh.pop %v1218
      %v1265 = vtanh.pop %v1223
      %v1266 = vtanh.pop %v1226
      %v1267 = vtanh.pop %v1231
      %v1268 = vtanh.pop %v1234
      %v1269 = vmul.f32 %v1237, 1.442695
      %v1270 = vpow.pop %v1269
      %v1271 = vmul.f32 %v1238, 1.442695
      %v1272 = vpow.pop %v1271
      %v1273 = vmul.f32 %v1239, 1.442695
      %v1274 = vpow.pop %v1273
      %v1275 = vmul.f32 %v1240, 1.442695
      %v1276 = vpow.pop %v1275
      %v1277 = vmul.f32 %v1241, 1.442695
      %v1278 = vpow.pop %v1277
      %v1279 = vmul.f32 %v1242, 1.442695
      %v1280 = vpow.pop %v1279
      %v1281 = vmul.f32 %v1243, 1.442695
      %v1282 = vpow.pop %v1281
      %v1283 = vmul.f32 %v1244, 1.442695
      %v1284 = vpow.pop %v1283
      %v1285 = vmul.f32 %v1245, 1.442695
      %v1286 = vpow.pop %v1285
      %v1287 = vmul.f32 %v1246, 1.442695
      %v1288 = vpow.pop %v1287
      %v1289 = vmul.f32 %v1247, 1.442695
      %v1290 = vpow.pop %v1289
      %v1291 = vmul.f32 %v1248, 1.442695
      %v1292 = vpow.pop %v1291
      %v1293 = vmul.f32 %v1249, 1.442695
      %v1294 = vpow.pop %v1293
      %v1295 = vmul.f32 %v1250, 1.442695
      %v1296 = vpow.pop %v1295
      %v1297 = vmul.f32 %v1251, 1.442695
      %v1298 = vpow.pop %v1297
      %v1299 = vmul.f32 %v1252, 1.442695
      %v1300 = vpow.pop %v1299
      %v1301 = vmul.f32 %v1253, 1.442695
      %v1302 = vpow.pop %v1301
      %v1303 = vmul.f32 %v1254, 1.442695
      %v1304 = vpow.pop %v1303
      %v1305 = vmul.f32 %v1255, 1.442695
      %v1306 = vpow.pop %v1305
      %v1307 = vmul.f32 %v1256, 1.442695
      %v1308 = vpow.pop %v1307
      %v1309 = vmul.f32 %v1257, 1.442695
      %v1310 = vpow.pop %v1309
      %v1311 = vmul.f32 %v1258, 1.442695
      %v1312 = vpow.pop %v1311
      %v1313 = vmul.f32 %v1259, 1.442695
      %v1314 = vpow.pop %v1313
      %v1315 = vmul.f32 %v1260, 1.442695
      %v1316 = vpow.pop %v1315
      %v1317 = vmul.f32 %v1261, 1.442695
      %v1318 = vpow.pop %v1317
      %v1319 = vmul.f32 %v1262, 1.442695
      %v1320 = vpow.pop %v1319
      %v1321 = vmul.f32 %v1263, 1.442695
      %v1322 = vpow.pop %v1321
      %v1323 = vmul.f32 %v1264, 1.442695
      %v1324 = vpow.pop %v1323
      %v1325 = vmul.f32 %v1265, 1.442695
      %v1326 = vpow.pop %v1325
      %v1327 = vmul.f32 %v1266, 1.442695
      %v1328 = vpow.pop %v1327
      %v1329 = vmul.f32 %v1267, 1.442695
      %v1330 = vpow.pop %v1329
      %v1331 = vmul.f32 %v1268, 1.442695
      %v1332 = vpow.pop %v1331
      %v1333 = vadd.f32 %v1270, 0.001
      %v1334 = vadd.f32 %v1272, 0.001
      %v1335 = vadd.f32 %v1274, 0.001
      %v1336 = vadd.f32 %v1276, 0.001
      %v1337 = vadd.f32 %v1278, 0.001
      %v1338 = vadd.f32 %v1280, 0.001
      %v1339 = vadd.f32 %v1282, 0.001
      %v1340 = vadd.f32 %v1284, 0.001
      %v1341 = vadd.f32 %v1286, 0.001
      %v1342 = vadd.f32 %v1288, 0.001
      %v1343 = vadd.f32 %v1290, 0.001
      %v1344 = vadd.f32 %v1292, 0.001
      %v1345 = vadd.f32 %v1294, 0.001
      %v1346 = vadd.f32 %v1296, 0.001
      %v1347 = vadd.f32 %v1298, 0.001
      %v1348 = vadd.f32 %v1300, 0.001
      %v1349 = vadd.f32 %v1302, 0.001
      %v1350 = vadd.f32 %v1304, 0.001
      %v1351 = vadd.f32 %v1306, 0.001
      %v1352 = vadd.f32 %v1308, 0.001
      %v1353 = vadd.f32 %v1310, 0.001
      %v1354 = vadd.f32 %v1312, 0.001
      %v1355 = vadd.f32 %v1314, 0.001
      %v1356 = vadd.f32 %v1316, 0.001
      %v1357 = vadd.f32 %v1318, 0.001
      %v1358 = vadd.f32 %v1320, 0.001
      %v1359 = vadd.f32 %v1322, 0.001
      %v1360 = vadd.f32 %v1324, 0.001
      %v1361 = vadd.f32 %v1326, 0.001
      %v1362 = vadd.f32 %v1328, 0.001
      %v1363 = vadd.f32 %v1330, 0.001
      %v1364 = vadd.f32 %v1332, 0.001
      %v1365 = vld [vmem:[%s323] sm:$0xff]
      %v1366 = vld [vmem:[%s323 + $0x8] sm:$0xff]
      %v1367 = vld [vmem:[%s323 + $0x10] sm:$0xff]
      %v1368 = vld [vmem:[%s323 + $0x18] sm:$0xff]
      %v1369 = vld [vmem:[%s323 + $0x20] sm:$0xff]
      %v1370 = vld [vmem:[%s323 + $0x28] sm:$0xff]
      %v1371 = vld [vmem:[%s323 + $0x30] sm:$0xff]
      %v1372 = vld [vmem:[%s323 + $0x38] sm:$0xff]
      %v1373 = vld [vmem:[%s323 + $0x40] sm:$0xff]
      %v1374 = vld [vmem:[%s323 + $0x48] sm:$0xff]
      %v1375 = vld [vmem:[%s323 + $0x50] sm:$0xff]
      %v1376 = vld [vmem:[%s323 + $0x58] sm:$0xff]
      %v1377 = vld [vmem:[%s323 + $0x60] sm:$0xff]
      %v1378 = vld [vmem:[%s323 + $0x68] sm:$0xff]
      %v1379 = vld [vmem:[%s323 + $0x70] sm:$0xff]
      %v1380 = vld [vmem:[%s323 + $0x78] sm:$0xff]
      %v1381 = vld [vmem:[%s323 + $0x80] sm:$0xff]
      %v1382 = vld [vmem:[%s323 + $0x88] sm:$0xff]
      %v1383 = vld [vmem:[%s323 + $0x90] sm:$0xff]
      %v1384 = vld [vmem:[%s323 + $0x98] sm:$0xff]
      %v1385 = vld [vmem:[%s323 + $0xa0] sm:$0xff]
      %v1386 = vld [vmem:[%s323 + $0xa8] sm:$0xff]
      %v1387 = vld [vmem:[%s323 + $0xb0] sm:$0xff]
      %v1388 = vld [vmem:[%s323 + $0xb8] sm:$0xff]
      %v1389 = vld [vmem:[%s323 + $0xc0] sm:$0xff]
      %v1390 = vld [vmem:[%s323 + $0xc8] sm:$0xff]
      %v1391 = vld [vmem:[%s323 + $0xd0] sm:$0xff]
      %v1392 = vld [vmem:[%s323 + $0xd8] sm:$0xff]
      %v1393 = vld [vmem:[%s323 + $0xe0] sm:$0xff]
      %v1394 = vld [vmem:[%s323 + $0xe8] sm:$0xff]
      %v1395 = vld [vmem:[%s323 + $0xf0] sm:$0xff]
      %v1396 = vld [vmem:[%s323 + $0xf8] sm:$0xff]
      %1429 = vrot.lane.b32.xlu0 %v1333, 120
      %v1430 = vpop.permute.xlu0 %1429
      %1431 = vrot.lane.b32.xlu0 %v1334, 120
      %v1432 = vpop.permute.xlu0 %1431
      %1433 = vrot.lane.b32.xlu0 %v1335, 120
      %v1434 = vpop.permute.xlu0 %1433
      %1435 = vrot.lane.b32.xlu0 %v1336, 120
      %v1436 = vpop.permute.xlu0 %1435
      %1437 = vrot.lane.b32.xlu0 %v1337, 120
      %v1438 = vpop.permute.xlu0 %1437
      %1439 = vrot.lane.b32.xlu0 %v1338, 120
      %v1440 = vpop.permute.xlu0 %1439
      %1441 = vrot.lane.b32.xlu0 %v1339, 120
      %v1442 = vpop.permute.xlu0 %1441
      %1443 = vrot.lane.b32.xlu0 %v1340, 120
      %v1444 = vpop.permute.xlu0 %1443
      %1445 = vrot.lane.b32.xlu0 %v1341, 120
      %v1446 = vpop.permute.xlu0 %1445
      %1447 = vrot.lane.b32.xlu0 %v1342, 120
      %v1448 = vpop.permute.xlu0 %1447
      %1449 = vrot.lane.b32.xlu0 %v1343, 120
      %v1450 = vpop.permute.xlu0 %1449
      %1451 = vrot.lane.b32.xlu0 %v1344, 120
      %v1452 = vpop.permute.xlu0 %1451
      %1453 = vrot.lane.b32.xlu0 %v1345, 120
      %v1454 = vpop.permute.xlu0 %1453
      %1455 = vrot.lane.b32.xlu0 %v1346, 120
      %v1456 = vpop.permute.xlu0 %1455
      %1457 = vrot.lane.b32.xlu0 %v1347, 120
      %v1458 = vpop.permute.xlu0 %1457
      %1459 = vrot.lane.b32.xlu0 %v1348, 120
      %v1460 = vpop.permute.xlu0 %1459
      %1461 = vrot.lane.b32.xlu0 %v1349, 120
      %v1462 = vpop.permute.xlu0 %1461
      %1463 = vrot.lane.b32.xlu0 %v1350, 120
      %v1464 = vpop.permute.xlu0 %1463
      %1465 = vrot.lane.b32.xlu0 %v1351, 120
      %v1466 = vpop.permute.xlu0 %1465
      %1467 = vrot.lane.b32.xlu0 %v1352, 120
      %v1468 = vpop.permute.xlu0 %1467
      %1469 = vrot.lane.b32.xlu0 %v1353, 120
      %v1470 = vpop.permute.xlu0 %1469
      %1471 = vrot.lane.b32.xlu0 %v1354, 120
      %v1472 = vpop.permute.xlu0 %1471
      %1473 = vrot.lane.b32.xlu0 %v1355, 120
      %v1474 = vpop.permute.xlu0 %1473
      %1475 = vrot.lane.b32.xlu0 %v1356, 120
      %v1476 = vpop.permute.xlu0 %1475
      %1477 = vrot.lane.b32.xlu0 %v1357, 120
      %v1478 = vpop.permute.xlu0 %1477
      %1479 = vrot.lane.b32.xlu0 %v1358, 120
      %v1480 = vpop.permute.xlu0 %1479
      %1481 = vrot.lane.b32.xlu0 %v1359, 120
      %v1482 = vpop.permute.xlu0 %1481
      %1483 = vrot.lane.b32.xlu0 %v1360, 120
      %v1484 = vpop.permute.xlu0 %1483
      %1485 = vrot.lane.b32.xlu0 %v1361, 120
      %v1486 = vpop.permute.xlu0 %1485
      %1487 = vrot.lane.b32.xlu0 %v1362, 120
      %v1488 = vpop.permute.xlu0 %1487
      %1489 = vrot.lane.b32.xlu0 %v1363, 120
      %v1490 = vpop.permute.xlu0 %1489
      %1491 = vrot.lane.b32.xlu0 %v1364, 120
      %v1492 = vpop.permute.xlu0 %1491
      %v1525 = vmul.f32 %v1365, %v1430
      %v1526 = vmul.f32 %v1366, %v1432
      %v1527 = vmul.f32 %v1367, %v1434
      %v1528 = vmul.f32 %v1368, %v1436
      %v1529 = vmul.f32 %v1369, %v1438
      %v1530 = vmul.f32 %v1370, %v1440
      %v1531 = vmul.f32 %v1371, %v1442
      %v1532 = vmul.f32 %v1372, %v1444
      %v1533 = vmul.f32 %v1373, %v1446
      %v1534 = vmul.f32 %v1374, %v1448
      %v1535 = vmul.f32 %v1375, %v1450
      %v1536 = vmul.f32 %v1376, %v1452
      %v1537 = vmul.f32 %v1377, %v1454
      %v1538 = vmul.f32 %v1378, %v1456
      %v1539 = vmul.f32 %v1379, %v1458
      %v1540 = vmul.f32 %v1380, %v1460
      %v1541 = vmul.f32 %v1381, %v1462
      %v1542 = vmul.f32 %v1382, %v1464
      %v1543 = vmul.f32 %v1383, %v1466
      %v1544 = vmul.f32 %v1384, %v1468
      %v1545 = vmul.f32 %v1385, %v1470
      %v1546 = vmul.f32 %v1386, %v1472
      %v1547 = vmul.f32 %v1387, %v1474
      %v1548 = vmul.f32 %v1388, %v1476
      %v1549 = vmul.f32 %v1389, %v1478
      %v1550 = vmul.f32 %v1390, %v1480
      %v1551 = vmul.f32 %v1391, %v1482
      %v1552 = vmul.f32 %v1392, %v1484
      %v1553 = vmul.f32 %v1393, %v1486
      %v1554 = vmul.f32 %v1394, %v1488
      %v1555 = vmul.f32 %v1395, %v1490
      %v1556 = vmul.f32 %v1396, %v1492
      %v1557 = vmax.f32 %v1525, -0.3
      %v1558 = vmax.f32 %v1526, -0.3
      %v1559 = vmax.f32 %v1527, -0.3
      %v1560 = vmax.f32 %v1528, -0.3
      %v1561 = vmax.f32 %v1529, -0.3
      %v1562 = vmax.f32 %v1530, -0.3
      %v1563 = vmax.f32 %v1531, -0.3
      %v1564 = vmax.f32 %v1532, -0.3
      %v1565 = vmax.f32 %v1533, -0.3
      %v1566 = vmax.f32 %v1534, -0.3
      %v1567 = vmax.f32 %v1535, -0.3
      %v1568 = vmax.f32 %v1536, -0.3
      %v1569 = vmax.f32 %v1537, -0.3
      %v1570 = vmax.f32 %v1538, -0.3
      %v1571 = vmax.f32 %v1539, -0.3
      %v1572 = vmax.f32 %v1540, -0.3
      %v1573 = vmax.f32 %v1541, -0.3
      %v1574 = vmax.f32 %v1542, -0.3
      %v1575 = vmax.f32 %v1543, -0.3
      %v1576 = vmax.f32 %v1544, -0.3
      %v1577 = vmax.f32 %v1545, -0.3
      %v1578 = vmax.f32 %v1546, -0.3
      %v1579 = vmax.f32 %v1547, -0.3
      %v1580 = vmax.f32 %v1548, -0.3
      %v1581 = vmax.f32 %v1549, -0.3
      %v1582 = vmax.f32 %v1550, -0.3
      %v1583 = vmax.f32 %v1551, -0.3
      %v1584 = vmax.f32 %v1552, -0.3
      %v1585 = vmax.f32 %v1553, -0.3
      %v1586 = vmax.f32 %v1554, -0.3
      %v1587 = vmax.f32 %v1555, -0.3
      %v1588 = vmax.f32 %v1556, -0.3
      %v1589 = vmin.f32 %v1557, 0.3
      %v1590 = vmin.f32 %v1558, 0.3
      %v1591 = vmin.f32 %v1559, 0.3
      %v1592 = vmin.f32 %v1560, 0.3
      %v1593 = vmin.f32 %v1561, 0.3
      %v1594 = vmin.f32 %v1562, 0.3
      %v1595 = vmin.f32 %v1563, 0.3
      %v1596 = vmin.f32 %v1564, 0.3
      %v1597 = vmin.f32 %v1565, 0.3
      %v1598 = vmin.f32 %v1566, 0.3
      %v1599 = vmin.f32 %v1567, 0.3
      %v1600 = vmin.f32 %v1568, 0.3
      %v1601 = vmin.f32 %v1569, 0.3
      %v1602 = vmin.f32 %v1570, 0.3
      %v1603 = vmin.f32 %v1571, 0.3
      %v1604 = vmin.f32 %v1572, 0.3
      %v1605 = vmin.f32 %v1573, 0.3
      %v1606 = vmin.f32 %v1574, 0.3
      %v1607 = vmin.f32 %v1575, 0.3
      %v1608 = vmin.f32 %v1576, 0.3
      %v1609 = vmin.f32 %v1577, 0.3
      %v1610 = vmin.f32 %v1578, 0.3
      %v1611 = vmin.f32 %v1579, 0.3
      %v1612 = vmin.f32 %v1580, 0.3
      %v1613 = vmin.f32 %v1581, 0.3
      %v1614 = vmin.f32 %v1582, 0.3
      %v1615 = vmin.f32 %v1583, 0.3
      %v1616 = vmin.f32 %v1584, 0.3
      %v1617 = vmin.f32 %v1585, 0.3
      %v1618 = vmin.f32 %v1586, 0.3
      %v1619 = vmin.f32 %v1587, 0.3
      %v1620 = vmin.f32 %v1588, 0.3
      %v1621 = vadd.f32 %v1111, %v1589
      %v1622 = vadd.f32 %v1114, %v1590
      %v1623 = vadd.f32 %v1119, %v1591
      %v1624 = vadd.f32 %v1122, %v1592
      %v1625 = vadd.f32 %v1127, %v1593
      %v1626 = vadd.f32 %v1130, %v1594
      %v1627 = vadd.f32 %v1135, %v1595
      %v1628 = vadd.f32 %v1138, %v1596
      %v1629 = vadd.f32 %v1143, %v1597
      %v1630 = vadd.f32 %v1146, %v1598
      %v1631 = vadd.f32 %v1151, %v1599
      %v1632 = vadd.f32 %v1154, %v1600
      %v1633 = vadd.f32 %v1159, %v1601
      %v1634 = vadd.f32 %v1162, %v1602
      %v1635 = vadd.f32 %v1167, %v1603
      %v1636 = vadd.f32 %v1170, %v1604
      %v1637 = vadd.f32 %v1175, %v1605
      %v1638 = vadd.f32 %v1178, %v1606
      %v1639 = vadd.f32 %v1183, %v1607
      %v1640 = vadd.f32 %v1186, %v1608
      %v1641 = vadd.f32 %v1191, %v1609
      %v1642 = vadd.f32 %v1194, %v1610
      %v1643 = vadd.f32 %v1199, %v1611
      %v1644 = vadd.f32 %v1202, %v1612
      %v1645 = vadd.f32 %v1207, %v1613
      %v1646 = vadd.f32 %v1210, %v1614
      %v1647 = vadd.f32 %v1215, %v1615
      %v1648 = vadd.f32 %v1218, %v1616
      %v1649 = vadd.f32 %v1223, %v1617
      %v1650 = vadd.f32 %v1226, %v1618
      %v1651 = vadd.f32 %v1231, %v1619
      %v1652 = vadd.f32 %v1234, %v1620
      %v1653 = vmax.f32 %v1621, -0.999999
      %v1654 = vmax.f32 %v1622, -0.999999
      %v1655 = vmax.f32 %v1623, -0.999999
      %v1656 = vmax.f32 %v1624, -0.999999
      %v1657 = vmax.f32 %v1625, -0.999999
      %v1658 = vmax.f32 %v1626, -0.999999
      %v1659 = vmax.f32 %v1627, -0.999999
      %v1660 = vmax.f32 %v1628, -0.999999
      %v1661 = vmax.f32 %v1629, -0.999999
      %v1662 = vmax.f32 %v1630, -0.999999
      %v1663 = vmax.f32 %v1631, -0.999999
      %v1664 = vmax.f32 %v1632, -0.999999
      %v1665 = vmax.f32 %v1633, -0.999999
      %v1666 = vmax.f32 %v1634, -0.999999
      %v1667 = vmax.f32 %v1635, -0.999999
      %v1668 = vmax.f32 %v1636, -0.999999
      %v1669 = vmax.f32 %v1637, -0.999999
      %v1670 = vmax.f32 %v1638, -0.999999
      %v1671 = vmax.f32 %v1639, -0.999999
      %v1672 = vmax.f32 %v1640, -0.999999
      %v1673 = vmax.f32 %v1641, -0.999999
      %v1674 = vmax.f32 %v1642, -0.999999
      %v1675 = vmax.f32 %v1643, -0.999999
      %v1676 = vmax.f32 %v1644, -0.999999
      %v1677 = vmax.f32 %v1645, -0.999999
      %v1678 = vmax.f32 %v1646, -0.999999
      %v1679 = vmax.f32 %v1647, -0.999999
      %v1680 = vmax.f32 %v1648, -0.999999
      %v1681 = vmax.f32 %v1649, -0.999999
      %v1682 = vmax.f32 %v1650, -0.999999
      %v1683 = vmax.f32 %v1651, -0.999999
      %v1684 = vmax.f32 %v1652, -0.999999
      %v1685 = vmin.f32 %v1653, 0.999999
      %v1686 = vmin.f32 %v1654, 0.999999
      %v1687 = vmin.f32 %v1655, 0.999999
      %v1688 = vmin.f32 %v1656, 0.999999
      %v1689 = vmin.f32 %v1657, 0.999999
      %v1690 = vmin.f32 %v1658, 0.999999
      %v1691 = vmin.f32 %v1659, 0.999999
      %v1692 = vmin.f32 %v1660, 0.999999
      %v1693 = vmin.f32 %v1661, 0.999999
      %v1694 = vmin.f32 %v1662, 0.999999
      %v1695 = vmin.f32 %v1663, 0.999999
      %v1696 = vmin.f32 %v1664, 0.999999
      %v1697 = vmin.f32 %v1665, 0.999999
      %v1698 = vmin.f32 %v1666, 0.999999
      %v1699 = vmin.f32 %v1667, 0.999999
      %v1700 = vmin.f32 %v1668, 0.999999
      %v1701 = vmin.f32 %v1669, 0.999999
      %v1702 = vmin.f32 %v1670, 0.999999
      %v1703 = vmin.f32 %v1671, 0.999999
      %v1704 = vmin.f32 %v1672, 0.999999
      %v1705 = vmin.f32 %v1673, 0.999999
      %v1706 = vmin.f32 %v1674, 0.999999
      %v1707 = vmin.f32 %v1675, 0.999999
      %v1708 = vmin.f32 %v1676, 0.999999
      %v1709 = vmin.f32 %v1677, 0.999999
      %v1710 = vmin.f32 %v1678, 0.999999
      %v1711 = vmin.f32 %v1679, 0.999999
      %v1712 = vmin.f32 %v1680, 0.999999
      %v1713 = vmin.f32 %v1681, 0.999999
      %v1714 = vmin.f32 %v1682, 0.999999
      %v1715 = vmin.f32 %v1683, 0.999999
      %v1716 = vmin.f32 %v1684, 0.999999
      %vm1717 = vcmask 64512
      %1718 = vst.msk [vmem:[%s329] sm:$0xff] %vm1717, %v1685
      %1719 = vst.msk [vmem:[%s329 + $0x8] sm:$0xff] %vm1717, %v1686
      %1720 = vst.msk [vmem:[%s329 + $0x10] sm:$0xff] %vm1717, %v1687
      %1721 = vst.msk [vmem:[%s329 + $0x18] sm:$0xff] %vm1717, %v1688
      %1722 = vst.msk [vmem:[%s329 + $0x20] sm:$0xff] %vm1717, %v1689
      %1723 = vst.msk [vmem:[%s329 + $0x28] sm:$0xff] %vm1717, %v1690
      %1724 = vst.msk [vmem:[%s329 + $0x30] sm:$0xff] %vm1717, %v1691
      %1725 = vst.msk [vmem:[%s329 + $0x38] sm:$0xff] %vm1717, %v1692
      %1726 = vst.msk [vmem:[%s329 + $0x40] sm:$0xff] %vm1717, %v1693
      %1727 = vst.msk [vmem:[%s329 + $0x48] sm:$0xff] %vm1717, %v1694
      %1728 = vst.msk [vmem:[%s329 + $0x50] sm:$0xff] %vm1717, %v1695
      %1729 = vst.msk [vmem:[%s329 + $0x58] sm:$0xff] %vm1717, %v1696
      %1730 = vst.msk [vmem:[%s329 + $0x60] sm:$0xff] %vm1717, %v1697
      %1731 = vst.msk [vmem:[%s329 + $0x68] sm:$0xff] %vm1717, %v1698
      %1732 = vst.msk [vmem:[%s329 + $0x70] sm:$0xff] %vm1717, %v1699
      %1733 = vst.msk [vmem:[%s329 + $0x78] sm:$0xff] %vm1717, %v1700
      %1734 = vst.msk [vmem:[%s329 + $0x80] sm:$0xff] %vm1717, %v1701
      %1735 = vst.msk [vmem:[%s329 + $0x88] sm:$0xff] %vm1717, %v1702
      %1736 = vst.msk [vmem:[%s329 + $0x90] sm:$0xff] %vm1717, %v1703
      %1737 = vst.msk [vmem:[%s329 + $0x98] sm:$0xff] %vm1717, %v1704
      %1738 = vst.msk [vmem:[%s329 + $0xa0] sm:$0xff] %vm1717, %v1705
      %1739 = vst.msk [vmem:[%s329 + $0xa8] sm:$0xff] %vm1717, %v1706
      %1740 = vst.msk [vmem:[%s329 + $0xb0] sm:$0xff] %vm1717, %v1707
      %1741 = vst.msk [vmem:[%s329 + $0xb8] sm:$0xff] %vm1717, %v1708
      %1742 = vst.msk [vmem:[%s329 + $0xc0] sm:$0xff] %vm1717, %v1709
      %1743 = vst.msk [vmem:[%s329 + $0xc8] sm:$0xff] %vm1717, %v1710
      %1744 = vst.msk [vmem:[%s329 + $0xd0] sm:$0xff] %vm1717, %v1711
      %1745 = vst.msk [vmem:[%s329 + $0xd8] sm:$0xff] %vm1717, %v1712
      %1746 = vst.msk [vmem:[%s329 + $0xe0] sm:$0xff] %vm1717, %v1713
      %1747 = vst.msk [vmem:[%s329 + $0xe8] sm:$0xff] %vm1717, %v1714
      %1748 = vst.msk [vmem:[%s329 + $0xf0] sm:$0xff] %vm1717, %v1715
      %1749 = vst.msk [vmem:[%s329 + $0xf8] sm:$0xff] %vm1717, %v1716
      %s1750 = smul.u32 32, %s19
      %p1751 = scmp.lt.s32.totalorder %s1750, 63
      %s1752 = scalar_select %p1751, %s1750, 63
      %s1753 = smul.addr %s1752, 8
      %s1754 = scalar_lea.vmem %s8, %s1753
      // Predicated region
      $region53: #{tpu_custom_call.1} parent=51 // pred_check
        %p1755 = pneg %p215
      $region54: #{tpu_custom_call.1} parent=51 // pred_check_branch
        %1757 = sbr.rel (%p1755) target = $region56
      $region55: #{tpu_custom_call.1} parent=51 // pred_region
        %s1758 = smul.u32 32, %s19
      $region56: #{tpu_custom_call.1} parent=51 // pred_fallthru
        _
    $region52: #{tpu_custom_call.1} parent=5 // pred_fallthru
      _
    %p1759 = scmp.le.s32.totalorder 2, %s14
    // Predicated region
    $region57: #{tpu_custom_call.1} parent=5 // pred_check
      %p1760 = pneg %p1759
    $region58: #{tpu_custom_call.1} parent=5 // pred_check_branch
      %1762 = sbr.rel (%p1760) target = $region60
    $region59: #{tpu_custom_call.1} parent=5 // pred_region
      %s1763 = ssub.s32 %s14, 2
      // Predicated region
      $region61: #{tpu_custom_call.1} parent=59 // pred_check
        %p1764 = pneg %p221
      $region62: #{tpu_custom_call.1} parent=59 // pred_check_branch
        %1766 = sbr.rel (%p1764) target = $region64
      $region63: #{tpu_custom_call.1} parent=59 // pred_region
        %s1767 = smul.u32 32, %s20
        %p1768 = scmp.lt.s32.totalorder %s1767, 63
        %s1769 = scalar_select %p1768, %s1767, 63
        %s1770 = smul.addr %s1769, 8
        %s1771 = scalar_lea.vmem %s8, %s1770
      $region64: #{tpu_custom_call.1} parent=59 // pred_fallthru
        _
    $region60: #{tpu_custom_call.1} parent=5 // pred_fallthru
      _
  $region6: #{tpu_custom_call.1} parent=0 // loop_footer
    %s18 = sadd.s32 1, %s14
  $region7: #{tpu_custom_call.1} parent=0 // loop_footer_branch
    %13 = sbr.rel target = $region3
  $region8: #{tpu_custom_call.1} parent=0 // loop_exit
    _

</llo_original>
